<compile_context>
chip_gen: v7x
topology: tpu7x:2x2x1
jax: 0.10.0
libtpu: 0.0.40
codegen_flags: <defaults>
</compile_context>

<pallas_src>
import functools

import jax
import jax.numpy as jnp
from jax.experimental import pallas as pl
from jax.experimental.pallas import tpu as pltpu


def _fusion_three_kernel(
    x_ref,      # (1, H, W*C)      residual input x (fused W*C lane axis)
    y_ref,      # (1, H, W*C)
    z_ref,      # (1, H, W*C)
    nrm1_ref,   # (3, W*C)   [normx1 scale, normy scale, combined shift], tiled
    nrm2_ref,   # (3, W*C)   [normx2 scale, normz scale, combined shift], tiled
    dwt1_ref,   # (K*K, W*C) depthwise weights (BN scale folded), tiled over W
    dwt2_ref,   # (K*K, W*C)
    pw1_ref,    # (W*C, W*C) block-diag 0.5*pw1
    pw2_ref,    # (W*C, W*C) block-diag 0.5*pw2
    bias_ref,   # (2, W*C)   [branch bias, mlp bias], tiled
    mlpw_ref,   # (W*C, W*C) block-diag (I + diag(norm2_scale) @ mlp_w)
    out_ref,    # (1, H, W*C)
    s_scr,      # VMEM (Hp, Wp*C) halo scratch (reused by both branches)
    *, H, W, C, K):

    WC = W * C
    pad = (K - 1) // 2
    x = x_ref[0]                                   # (H, WC)

    # Zero the halo frame once per grid step.  The interior (content + reflect
    # row/col) is fully overwritten by each branch, so the zero frame stays
    # valid for both branches.  (Not gated on program_id==0 so it stays
    # correct when the batch axis is split across TensorCores.)
    s_scr[...] = jnp.zeros_like(s_scr)

    def branch(other_ref, nrm_ref, dwt_ref):
        # folded norms + add: normx(x) + norm_other(other)
        content = x * nrm_ref[0, :] + other_ref[0] * nrm_ref[1, :] + nrm_ref[2, :]
        # Build the padded halo slab in VMEM:
        #   reflect pad (0,1,0,1): new col W == col W-2, new row H == row H-2
        #   (corner == [H-2, W-2]); then `pad` zeros on every side (conv pad).
        s_scr[pl.ds(pad, H), pl.ds(pad * C, WC)] = content
        s_scr[pl.ds(pad, H), pl.ds((pad + W) * C, C)] = (
            content[:, (W - 2) * C:(W - 1) * C])
        s_scr[pl.ds(pad + H, 1), pl.ds(pad * C, WC)] = content[H - 2:H - 1, :]
        s_scr[pl.ds(pad + H, 1), pl.ds((pad + W) * C, C)] = (
            content[H - 2:H - 1, (W - 2) * C:(W - 1) * C])
        # Depthwise KxK conv, fully unrolled; in the fused layout the kw shift
        # is a static lane offset of kw*C (lane rotations -> XLU, off the VALU
        # critical path).
        acc = jnp.zeros((H, WC), jnp.float32)
        for kh in range(K):
            rows = s_scr[kh:kh + H, :]              # (H, Wp*C) static ref slice
            for kw in range(K):
                acc = acc + rows[:, kw * C:kw * C + WC] * dwt_ref[kh * K + kw, :]
        return acc

    a1 = branch(y_ref, nrm1_ref, dwt1_ref)
    a2 = branch(z_ref, nrm2_ref, dwt2_ref)

    # Fused pointwise convs of both branches (0.5 residual factor folded in)
    # plus the x residual and the folded BN-shift bias.
    xm = (x
          + jnp.dot(a1, pw1_ref[...], preferred_element_type=jnp.float32)
          + jnp.dot(a2, pw2_ref[...], preferred_element_type=jnp.float32)
          + bias_ref[0, :])

    # norm2 -> mlp fc2 -> residual, folded into a single matmul:
    #   out = xm @ (I + diag(norm2_scale) @ mlp_w)_blockdiag + bias
    out_ref[0] = (jnp.dot(xm, mlpw_ref[...], preferred_element_type=jnp.float32)
                  + bias_ref[1, :])


@functools.partial(jax.jit, static_argnames=("K",))
def fusion_three_forward(x, y, z, params, *, K):
    """x, y, z: NCHW float32.  Requires y/z channel count == x channel count."""
    B, C, H, W = x.shape
    WC = W * C
    pad = (K - 1) // 2
    Hp = H + 1 + 2 * pad
    Wp = W + 1 + 2 * pad
    hi = jax.lax.Precision.HIGHEST

    def to_fused(t):                               # NCHW -> (B, H, W*C)
        return jnp.transpose(t, (0, 2, 3, 1)).reshape(t.shape[0], H, WC)

    xf, yf, zf = map(to_fused, (x, y, z))

    tile = lambda v: jnp.tile(v, W)                              # (C,) -> (WC,)
    bdiag = lambda m: jnp.kron(jnp.eye(W, dtype=m.dtype), m)     # (C,C)->(WC,WC)

    nx1, ny = params['normx1'], params['normy']
    nx2, nz = params['normx2'], params['normz']
    nrm1 = jnp.stack([tile(nx1[0]), tile(ny[0]), tile(nx1[1] + ny[1])])
    nrm2 = jnp.stack([tile(nx2[0]), tile(nz[0]), tile(nx2[1] + nz[1])])

    # Fold the SeparableConvBN BatchNorm scale into the depthwise weights and
    # its shift into a post-pointwise bias; tile over W for the fused lane axis.
    def fold_dw(dw, bnp):
        dwf = dw * bnp[0][None, None, :]                          # (K,K,C)
        return jnp.tile(dwf.reshape(K * K, 1, C), (1, W, 1)).reshape(K * K, WC)

    dwt1 = fold_dw(params['dw1'], params['bn_proj1'])
    dwt2 = fold_dw(params['dw2'], params['bn_proj2'])

    pw1bd = bdiag(0.5 * params['pw1'])                             # (WC, WC)
    pw2bd = bdiag(0.5 * params['pw2'])                             # (WC, WC)
    branch_bias = 0.5 * (
        jnp.einsum('c,cd->d', params['bn_proj1'][1], params['pw1'], precision=hi)
        + jnp.einsum('c,cd->d', params['bn_proj2'][1], params['pw2'], precision=hi))

    n2s, n2b = params['norm2'][0], params['norm2'][1]
    # Fold the final residual identity + norm2 scale into the mlp weight.
    mlpw = bdiag(jnp.eye(C, dtype=jnp.float32)
                 + n2s[:, None] * params['mlp_w'])                 # (WC, WC)
    mlp_bias = (jnp.einsum('c,cd->d', n2b, params['mlp_w'], precision=hi)
                + params['mlp_b'][0])
    bias = jnp.stack([tile(branch_bias), tile(mlp_bias)])          # (2, WC)

    kernel = functools.partial(_fusion_three_kernel, H=H, W=W, C=C, K=K)
    img_spec = pl.BlockSpec((1, H, WC), lambda b: (b, 0, 0))
    cst = lambda shape: pl.BlockSpec(shape, lambda b: (0, 0))

    out = pl.pallas_call(
        kernel,
        out_shape=jax.ShapeDtypeStruct((B, H, WC), jnp.float32),
        grid=(B,),
        in_specs=[
            img_spec, img_spec, img_spec,
            cst((3, WC)), cst((3, WC)),
            cst((K * K, WC)), cst((K * K, WC)),
            cst((WC, WC)), cst((WC, WC)),
            cst((2, WC)),
            cst((WC, WC)),
        ],
        out_specs=img_spec,
        scratch_shapes=[pltpu.VMEM((Hp, Wp * C), jnp.float32)],
        input_output_aliases={0: 0},
        compiler_params=pltpu.CompilerParams(
            dimension_semantics=("parallel",)),
    )(xf, yf, zf, nrm1, nrm2, dwt1, dwt2, pw1bd, pw2bd, bias, mlpw)

    return jnp.transpose(out.reshape(B, H, W, C), (0, 3, 1, 2))


def ref_forward(x, y, z, params, *, K):
    """Pure-JAX reference (same math, NCHW in/out)."""
    B, C, H, W = x.shape
    to_nhwc = lambda t: jnp.transpose(t, (0, 2, 3, 1))
    xh, yh, zh = map(to_nhwc, (x, y, z))
    bn = lambda t, p: t * p[0] + p[1]
    pad = (K - 1) // 2
    hi = jax.lax.Precision.HIGHEST

    def fusion_attn(s, dw, bnp, pw):
        sp = jnp.pad(s, ((0, 0), (0, 1), (0, 1), (0, 0)), mode='reflect')
        sp = jnp.pad(sp, ((0, 0), (pad, pad), (pad, pad), (0, 0)))
        conv = jax.lax.conv_general_dilated(
            sp, dw[:, :, None, :], (1, 1), 'VALID',
            dimension_numbers=('NHWC', 'HWIO', 'NHWC'),
            feature_group_count=C, precision=hi)
        conv = conv * bnp[0] + bnp[1]
        return jnp.einsum('bhwc,cd->bhwd', conv, pw, precision=hi)

    a1 = fusion_attn(bn(xh, params['normx1']) + bn(yh, params['normy']),
                     params['dw1'], params['bn_proj1'], params['pw1'])
    a2 = fusion_attn(bn(xh, params['normx2']) + bn(zh, params['normz']),
                     params['dw2'], params['bn_proj2'], params['pw2'])
    xm = xh + 0.5 * a1 + 0.5 * a2
    n2 = xm * params['norm2'][0] + params['norm2'][1]
    out = (xm + jnp.einsum('bhwc,cd->bhwd', n2, params['mlp_w'], precision=hi)
           + params['mlp_b'][0])
    return jnp.transpose(out, (0, 3, 1, 2))


def _fold_bn(gamma, beta, mean, var, eps=1e-5):
    scale = gamma / jnp.sqrt(var + eps)
    shift = beta - mean * scale
    return jnp.stack([scale, shift]).astype(jnp.float32)   # (2, C)


def make_params(key, C, K):
    keys = iter(jax.random.split(key, 40))   # 34 keys needed; headroom avoids StopIteration

    def bn_params():
        gamma = 1.0 + 0.1 * jax.random.normal(next(keys), (C,))
        beta = 0.1 * jax.random.normal(next(keys), (C,))
        mean = 0.1 * jax.random.normal(next(keys), (C,))
        var = 1.0 + 0.1 * jax.random.uniform(next(keys), (C,))
        return _fold_bn(gamma, beta, mean, var)

    p = {
        'normx1': bn_params(), 'normy': bn_params(),
        'normx2': bn_params(), 'normz': bn_params(),
        'norm2': bn_params(),
        # attnxy proj = SeparableConvBN(dim, dim, kernel_size=window_size)
        'dw1': 0.1 * jax.random.normal(next(keys), (K, K, C), jnp.float32),
        'bn_proj1': bn_params(),
        'pw1': 0.2 * jax.random.normal(next(keys), (C, C), jnp.float32),
        # attnxz proj
        'dw2': 0.1 * jax.random.normal(next(keys), (K, K, C), jnp.float32),
        'bn_proj2': bn_params(),
        'pw2': 0.2 * jax.random.normal(next(keys), (C, C), jnp.float32),
        # Mlp_attention.fc2 : Conv2d(dim, dim, 1, bias=True)
        'mlp_w': 0.2 * jax.random.normal(next(keys), (C, C), jnp.float32),
        'mlp_b': 0.1 * jax.random.normal(next(keys), (1, C), jnp.float32),
    }
    return p


if __name__ == "__main__":
    B, C, H, W = 2, 8, 16, 16      # dim = ssmdims = 8 (module requires ssmdims == dim)
    K = 8                          # window_size  -> W*C = 128 (lane dense)

    key = jax.random.PRNGKey(0)
    kx, ky, kz, kp = jax.random.split(key, 4)
    x = jax.random.normal(kx, (B, C, H, W), jnp.float32)
    y = jax.random.normal(ky, (B, C, H, W), jnp.float32)
    z = jax.random.normal(kz, (B, C, H, W), jnp.float32)
    params = make_params(kp, C, K)

    out = jax.block_until_ready(fusion_three_forward(x, y, z, params, K=K))
    ref = jax.block_until_ready(ref_forward(x, y, z, params, K=K))
    if not jnp.allclose(out, ref, atol=5e-3, rtol=5e-3):
        err = float(jnp.max(jnp.abs(out - ref)))
        raise RuntimeError(f"Pallas kernel does not match reference (max abs err {err})")
    print("KERNEL_OK")
</pallas_src>

<mosaic_0001>
module attributes {stable_mosaic.version = 11 : i64} {
  func.func @_fusion_three_kernel(%arg0: i32, %arg1: memref<1x16x128xf32, #tpu.memory_space<vmem>>, %arg2: memref<1x16x128xf32, #tpu.memory_space<vmem>>, %arg3: memref<1x16x128xf32, #tpu.memory_space<vmem>>, %arg4: memref<3x128xf32, #tpu.memory_space<vmem>>, %arg5: memref<3x128xf32, #tpu.memory_space<vmem>>, %arg6: memref<64x128xf32, #tpu.memory_space<vmem>>, %arg7: memref<64x128xf32, #tpu.memory_space<vmem>>, %arg8: memref<128x128xf32, #tpu.memory_space<vmem>>, %arg9: memref<128x128xf32, #tpu.memory_space<vmem>>, %arg10: memref<2x128xf32, #tpu.memory_space<vmem>>, %arg11: memref<128x128xf32, #tpu.memory_space<vmem>>, %arg12: memref<1x16x128xf32, #tpu.memory_space<vmem>>, %arg13: memref<23x184xf32, #tpu.memory_space<vmem>>) attributes {dimension_semantics = [#tpu.dimension_semantics<parallel>], iteration_bounds = array<i64: 2>, scalar_prefetch = 0 : i64, scratch_operands = 1 : i64, tpu.core_type = #tpu.core_type<tc>, window_params = [{transform_indices = @transform_0, window_bounds = array<i64: 1, 16, 128>}, {transform_indices = @transform_1, window_bounds = array<i64: 1, 16, 128>}, {transform_indices = @transform_2, window_bounds = array<i64: 1, 16, 128>}, {pipeline_mode = #tpu.pipeline_mode<synchronous>, transform_indices = @transform_3, window_bounds = array<i64: 3, 128>}, {pipeline_mode = #tpu.pipeline_mode<synchronous>, transform_indices = @transform_4, window_bounds = array<i64: 3, 128>}, {pipeline_mode = #tpu.pipeline_mode<synchronous>, transform_indices = @transform_5, window_bounds = array<i64: 64, 128>}, {pipeline_mode = #tpu.pipeline_mode<synchronous>, transform_indices = @transform_6, window_bounds = array<i64: 64, 128>}, {pipeline_mode = #tpu.pipeline_mode<synchronous>, transform_indices = @transform_7, window_bounds = array<i64: 128, 128>}, {pipeline_mode = #tpu.pipeline_mode<synchronous>, transform_indices = @transform_8, window_bounds = array<i64: 128, 128>}, {pipeline_mode = #tpu.pipeline_mode<synchronous>, transform_indices = @transform_9, window_bounds = array<i64: 2, 128>}, {pipeline_mode = #tpu.pipeline_mode<synchronous>, transform_indices = @transform_10, window_bounds = array<i64: 128, 128>}, {transform_indices = @transform_11, window_bounds = array<i64: 1, 16, 128>}]} {
    %c0 = arith.constant 0 : index
    %c0_0 = arith.constant 0 : index
    %c0_1 = arith.constant 0 : index
    %0 = vector.load %arg1[%c0, %c0_0, %c0_1] : memref<1x16x128xf32, #tpu.memory_space<vmem>>, vector<1x16x128xf32>
    %1 = vector.shape_cast %0 : vector<1x16x128xf32> to vector<16x128xf32>
    %cst = arith.constant 0.000000e+00 : f32
    %2 = vector.broadcast %cst : f32 to vector<23x184xf32>
    %c0_2 = arith.constant 0 : index
    %c0_3 = arith.constant 0 : index
    %3 = vector.load %arg13[%c0_2, %c0_3] : memref<23x184xf32, #tpu.memory_space<vmem>>, vector<23x184xf32>
    tpu.vector_store %arg13[%c0_2, %c0_3], %2 {strides = array<i32>} : memref<23x184xf32, #tpu.memory_space<vmem>>, vector<23x184xf32>,
    %c0_4 = arith.constant 0 : index
    %c0_5 = arith.constant 0 : index
    %4 = vector.load %arg4[%c0_4, %c0_5] : memref<3x128xf32, #tpu.memory_space<vmem>>, vector<1x128xf32>
    %5 = vector.shape_cast %4 : vector<1x128xf32> to vector<128xf32>
    %6 = vector.shape_cast %5 : vector<128xf32> to vector<1x128xf32>
    %7 = vector.broadcast %6 : vector<1x128xf32> to vector<16x128xf32>
    %8 = arith.mulf %1, %7 : vector<16x128xf32>
    %c0_6 = arith.constant 0 : index
    %c0_7 = arith.constant 0 : index
    %c0_8 = arith.constant 0 : index
    %9 = vector.load %arg2[%c0_6, %c0_7, %c0_8] : memref<1x16x128xf32, #tpu.memory_space<vmem>>, vector<1x16x128xf32>
    %10 = vector.shape_cast %9 : vector<1x16x128xf32> to vector<16x128xf32>
    %c1 = arith.constant 1 : index
    %c0_9 = arith.constant 0 : index
    %11 = vector.load %arg4[%c1, %c0_9] : memref<3x128xf32, #tpu.memory_space<vmem>>, vector<1x128xf32>
    %12 = vector.shape_cast %11 : vector<1x128xf32> to vector<128xf32>
    %13 = vector.shape_cast %12 : vector<128xf32> to vector<1x128xf32>
    %14 = vector.broadcast %13 : vector<1x128xf32> to vector<16x128xf32>
    %15 = arith.mulf %10, %14 : vector<16x128xf32>
    %16 = arith.addf %8, %15 : vector<16x128xf32>
    %c2 = arith.constant 2 : index
    %c0_10 = arith.constant 0 : index
    %17 = vector.load %arg4[%c2, %c0_10] : memref<3x128xf32, #tpu.memory_space<vmem>>, vector<1x128xf32>
    %18 = vector.shape_cast %17 : vector<1x128xf32> to vector<128xf32>
    %19 = vector.shape_cast %18 : vector<128xf32> to vector<1x128xf32>
    %20 = vector.broadcast %19 : vector<1x128xf32> to vector<16x128xf32>
    %21 = arith.addf %16, %20 : vector<16x128xf32>
    %c3 = arith.constant 3 : index
    %c24 = arith.constant 24 : index
    %22 = vector.load %arg13[%c3, %c24] : memref<23x184xf32, #tpu.memory_space<vmem>>, vector<16x128xf32>
    tpu.vector_store %arg13[%c3, %c24], %21 {strides = array<i32>} : memref<23x184xf32, #tpu.memory_space<vmem>>, vector<16x128xf32>,
    %23 = vector.extract_strided_slice %21 {offsets = [0, 112], sizes = [16, 8], strides = [1, 1]} : vector<16x128xf32> to vector<16x8xf32>
    %c3_11 = arith.constant 3 : index
    %c152 = arith.constant 152 : index
    %24 = vector.load %arg13[%c3_11, %c152] : memref<23x184xf32, #tpu.memory_space<vmem>>, vector<16x8xf32>
    tpu.vector_store %arg13[%c3_11, %c152], %23 {strides = array<i32>} : memref<23x184xf32, #tpu.memory_space<vmem>>, vector<16x8xf32>,
    %25 = vector.extract_strided_slice %21 {offsets = [14, 0], sizes = [1, 128], strides = [1, 1]} : vector<16x128xf32> to vector<1x128xf32>
    %c19 = arith.constant 19 : index
    %c24_12 = arith.constant 24 : index
    %26 = vector.load %arg13[%c19, %c24_12] : memref<23x184xf32, #tpu.memory_space<vmem>>, vector<1x128xf32>
    tpu.vector_store %arg13[%c19, %c24_12], %25 {strides = array<i32>} : memref<23x184xf32, #tpu.memory_space<vmem>>, vector<1x128xf32>,
    %27 = vector.extract_strided_slice %21 {offsets = [14, 112], sizes = [1, 8], strides = [1, 1]} : vector<16x128xf32> to vector<1x8xf32>
    %c19_13 = arith.constant 19 : index
    %c152_14 = arith.constant 152 : index
    %28 = vector.load %arg13[%c19_13, %c152_14] : memref<23x184xf32, #tpu.memory_space<vmem>>, vector<1x8xf32>
    tpu.vector_store %arg13[%c19_13, %c152_14], %27 {strides = array<i32>} : memref<23x184xf32, #tpu.memory_space<vmem>>, vector<1x8xf32>,
    %cst_15 = arith.constant 0.000000e+00 : f32
    %29 = vector.broadcast %cst_15 : f32 to vector<16x128xf32>
    %c0_16 = arith.constant 0 : index
    %c0_17 = arith.constant 0 : index
    %30 = vector.load %arg13[%c0_16, %c0_17] : memref<23x184xf32, #tpu.memory_space<vmem>>, vector<16x184xf32>
    %31 = vector.extract_strided_slice %30 {offsets = [0, 0], sizes = [16, 128], strides = [1, 1]} : vector<16x184xf32> to vector<16x128xf32>
    %c0_18 = arith.constant 0 : index
    %c0_19 = arith.constant 0 : index
    %32 = vector.load %arg6[%c0_18, %c0_19] : memref<64x128xf32, #tpu.memory_space<vmem>>, vector<1x128xf32>
    %33 = vector.shape_cast %32 : vector<1x128xf32> to vector<128xf32>
    %34 = vector.shape_cast %33 : vector<128xf32> to vector<1x128xf32>
    %35 = vector.broadcast %34 : vector<1x128xf32> to vector<16x128xf32>
    %36 = arith.mulf %31, %35 : vector<16x128xf32>
    %37 = arith.addf %29, %36 : vector<16x128xf32>
    %38 = vector.extract_strided_slice %30 {offsets = [0, 8], sizes = [16, 128], strides = [1, 1]} : vector<16x184xf32> to vector<16x128xf32>
    %c1_20 = arith.constant 1 : index
    %c0_21 = arith.constant 0 : index
    %39 = vector.load %arg6[%c1_20, %c0_21] : memref<64x128xf32, #tpu.memory_space<vmem>>, vector<1x128xf32>
    %40 = vector.shape_cast %39 : vector<1x128xf32> to vector<128xf32>
    %41 = vector.shape_cast %40 : vector<128xf32> to vector<1x128xf32>
    %42 = vector.broadcast %41 : vector<1x128xf32> to vector<16x128xf32>
    %43 = arith.mulf %38, %42 : vector<16x128xf32>
    %44 = arith.addf %37, %43 : vector<16x128xf32>
    %45 = vector.extract_strided_slice %30 {offsets = [0, 16], sizes = [16, 128], strides = [1, 1]} : vector<16x184xf32> to vector<16x128xf32>
    %c2_22 = arith.constant 2 : index
    %c0_23 = arith.constant 0 : index
    %46 = vector.load %arg6[%c2_22, %c0_23] : memref<64x128xf32, #tpu.memory_space<vmem>>, vector<1x128xf32>
    %47 = vector.shape_cast %46 : vector<1x128xf32> to vector<128xf32>
    %48 = vector.shape_cast %47 : vector<128xf32> to vector<1x128xf32>
    %49 = vector.broadcast %48 : vector<1x128xf32> to vector<16x128xf32>
    %50 = arith.mulf %45, %49 : vector<16x128xf32>
    %51 = arith.addf %44, %50 : vector<16x128xf32>
    %52 = vector.extract_strided_slice %30 {offsets = [0, 24], sizes = [16, 128], strides = [1, 1]} : vector<16x184xf32> to vector<16x128xf32>
    %c3_24 = arith.constant 3 : index
    %c0_25 = arith.constant 0 : index
    %53 = vector.load %arg6[%c3_24, %c0_25] : memref<64x128xf32, #tpu.memory_space<vmem>>, vector<1x128xf32>
    %54 = vector.shape_cast %53 : vector<1x128xf32> to vector<128xf32>
    %55 = vector.shape_cast %54 : vector<128xf32> to vector<1x128xf32>
    %56 = vector.broadcast %55 : vector<1x128xf32> to vector<16x128xf32>
    %57 = arith.mulf %52, %56 : vector<16x128xf32>
    %58 = arith.addf %51, %57 : vector<16x128xf32>
    %59 = vector.extract_strided_slice %30 {offsets = [0, 32], sizes = [16, 128], strides = [1, 1]} : vector<16x184xf32> to vector<16x128xf32>
    %c4 = arith.constant 4 : index
    %c0_26 = arith.constant 0 : index
    %60 = vector.load %arg6[%c4, %c0_26] : memref<64x128xf32, #tpu.memory_space<vmem>>, vector<1x128xf32>
    %61 = vector.shape_cast %60 : vector<1x128xf32> to vector<128xf32>
    %62 = vector.shape_cast %61 : vector<128xf32> to vector<1x128xf32>
    %63 = vector.broadcast %62 : vector<1x128xf32> to vector<16x128xf32>
    %64 = arith.mulf %59, %63 : vector<16x128xf32>
    %65 = arith.addf %58, %64 : vector<16x128xf32>
    %66 = vector.extract_strided_slice %30 {offsets = [0, 40], sizes = [16, 128], strides = [1, 1]} : vector<16x184xf32> to vector<16x128xf32>
    %c5 = arith.constant 5 : index
    %c0_27 = arith.constant 0 : index
    %67 = vector.load %arg6[%c5, %c0_27] : memref<64x128xf32, #tpu.memory_space<vmem>>, vector<1x128xf32>
    %68 = vector.shape_cast %67 : vector<1x128xf32> to vector<128xf32>
    %69 = vector.shape_cast %68 : vector<128xf32> to vector<1x128xf32>
    %70 = vector.broadcast %69 : vector<1x128xf32> to vector<16x128xf32>
    %71 = arith.mulf %66, %70 : vector<16x128xf32>
    %72 = arith.addf %65, %71 : vector<16x128xf32>
    %73 = vector.extract_strided_slice %30 {offsets = [0, 48], sizes = [16, 128], strides = [1, 1]} : vector<16x184xf32> to vector<16x128xf32>
    %c6 = arith.constant 6 : index
    %c0_28 = arith.constant 0 : index
    %74 = vector.load %arg6[%c6, %c0_28] : memref<64x128xf32, #tpu.memory_space<vmem>>, vector<1x128xf32>
    %75 = vector.shape_cast %74 : vector<1x128xf32> to vector<128xf32>
    %76 = vector.shape_cast %75 : vector<128xf32> to vector<1x128xf32>
    %77 = vector.broadcast %76 : vector<1x128xf32> to vector<16x128xf32>
    %78 = arith.mulf %73, %77 : vector<16x128xf32>
    %79 = arith.addf %72, %78 : vector<16x128xf32>
    %80 = vector.extract_strided_slice %30 {offsets = [0, 56], sizes = [16, 128], strides = [1, 1]} : vector<16x184xf32> to vector<16x128xf32>
    %c7 = arith.constant 7 : index
    %c0_29 = arith.constant 0 : index
    %81 = vector.load %arg6[%c7, %c0_29] : memref<64x128xf32, #tpu.memory_space<vmem>>, vector<1x128xf32>
    %82 = vector.shape_cast %81 : vector<1x128xf32> to vector<128xf32>
    %83 = vector.shape_cast %82 : vector<128xf32> to vector<1x128xf32>
    %84 = vector.broadcast %83 : vector<1x128xf32> to vector<16x128xf32>
    %85 = arith.mulf %80, %84 : vector<16x128xf32>
    %86 = arith.addf %79, %85 : vector<16x128xf32>
    %c1_30 = arith.constant 1 : index
    %c0_31 = arith.constant 0 : index
    %87 = vector.load %arg13[%c1_30, %c0_31] : memref<23x184xf32, #tpu.memory_space<vmem>>, vector<16x184xf32>
    %88 = vector.extract_strided_slice %87 {offsets = [0, 0], sizes = [16, 128], strides = [1, 1]} : vector<16x184xf32> to vector<16x128xf32>
    %c8 = arith.constant 8 : index
    %c0_32 = arith.constant 0 : index
    %89 = vector.load %arg6[%c8, %c0_32] : memref<64x128xf32, #tpu.memory_space<vmem>>, vector<1x128xf32>
    %90 = vector.shape_cast %89 : vector<1x128xf32> to vector<128xf32>
    %91 = vector.shape_cast %90 : vector<128xf32> to vector<1x128xf32>
    %92 = vector.broadcast %91 : vector<1x128xf32> to vector<16x128xf32>
    %93 = arith.mulf %88, %92 : vector<16x128xf32>
    %94 = arith.addf %86, %93 : vector<16x128xf32>
    %95 = vector.extract_strided_slice %87 {offsets = [0, 8], sizes = [16, 128], strides = [1, 1]} : vector<16x184xf32> to vector<16x128xf32>
    %c9 = arith.constant 9 : index
    %c0_33 = arith.constant 0 : index
    %96 = vector.load %arg6[%c9, %c0_33] : memref<64x128xf32, #tpu.memory_space<vmem>>, vector<1x128xf32>
    %97 = vector.shape_cast %96 : vector<1x128xf32> to vector<128xf32>
    %98 = vector.shape_cast %97 : vector<128xf32> to vector<1x128xf32>
    %99 = vector.broadcast %98 : vector<1x128xf32> to vector<16x128xf32>
    %100 = arith.mulf %95, %99 : vector<16x128xf32>
    %101 = arith.addf %94, %100 : vector<16x128xf32>
    %102 = vector.extract_strided_slice %87 {offsets = [0, 16], sizes = [16, 128], strides = [1, 1]} : vector<16x184xf32> to vector<16x128xf32>
    %c10 = arith.constant 10 : index
    %c0_34 = arith.constant 0 : index
    %103 = vector.load %arg6[%c10, %c0_34] : memref<64x128xf32, #tpu.memory_space<vmem>>, vector<1x128xf32>
    %104 = vector.shape_cast %103 : vector<1x128xf32> to vector<128xf32>
    %105 = vector.shape_cast %104 : vector<128xf32> to vector<1x128xf32>
    %106 = vector.broadcast %105 : vector<1x128xf32> to vector<16x128xf32>
    %107 = arith.mulf %102, %106 : vector<16x128xf32>
    %108 = arith.addf %101, %107 : vector<16x128xf32>
    %109 = vector.extract_strided_slice %87 {offsets = [0, 24], sizes = [16, 128], strides = [1, 1]} : vector<16x184xf32> to vector<16x128xf32>
    %c11 = arith.constant 11 : index
    %c0_35 = arith.constant 0 : index
    %110 = vector.load %arg6[%c11, %c0_35] : memref<64x128xf32, #tpu.memory_space<vmem>>, vector<1x128xf32>
    %111 = vector.shape_cast %110 : vector<1x128xf32> to vector<128xf32>
    %112 = vector.shape_cast %111 : vector<128xf32> to vector<1x128xf32>
    %113 = vector.broadcast %112 : vector<1x128xf32> to vector<16x128xf32>
    %114 = arith.mulf %109, %113 : vector<16x128xf32>
    %115 = arith.addf %108, %114 : vector<16x128xf32>
    %116 = vector.extract_strided_slice %87 {offsets = [0, 32], sizes = [16, 128], strides = [1, 1]} : vector<16x184xf32> to vector<16x128xf32>
    %c12 = arith.constant 12 : index
    %c0_36 = arith.constant 0 : index
    %117 = vector.load %arg6[%c12, %c0_36] : memref<64x128xf32, #tpu.memory_space<vmem>>, vector<1x128xf32>
    %118 = vector.shape_cast %117 : vector<1x128xf32> to vector<128xf32>
    %119 = vector.shape_cast %118 : vector<128xf32> to vector<1x128xf32>
    %120 = vector.broadcast %119 : vector<1x128xf32> to vector<16x128xf32>
    %121 = arith.mulf %116, %120 : vector<16x128xf32>
    %122 = arith.addf %115, %121 : vector<16x128xf32>
    %123 = vector.extract_strided_slice %87 {offsets = [0, 40], sizes = [16, 128], strides = [1, 1]} : vector<16x184xf32> to vector<16x128xf32>
    %c13 = arith.constant 13 : index
    %c0_37 = arith.constant 0 : index
    %124 = vector.load %arg6[%c13, %c0_37] : memref<64x128xf32, #tpu.memory_space<vmem>>, vector<1x128xf32>
    %125 = vector.shape_cast %124 : vector<1x128xf32> to vector<128xf32>
    %126 = vector.shape_cast %125 : vector<128xf32> to vector<1x128xf32>
    %127 = vector.broadcast %126 : vector<1x128xf32> to vector<16x128xf32>
    %128 = arith.mulf %123, %127 : vector<16x128xf32>
    %129 = arith.addf %122, %128 : vector<16x128xf32>
    %130 = vector.extract_strided_slice %87 {offsets = [0, 48], sizes = [16, 128], strides = [1, 1]} : vector<16x184xf32> to vector<16x128xf32>
    %c14 = arith.constant 14 : index
    %c0_38 = arith.constant 0 : index
    %131 = vector.load %arg6[%c14, %c0_38] : memref<64x128xf32, #tpu.memory_space<vmem>>, vector<1x128xf32>
    %132 = vector.shape_cast %131 : vector<1x128xf32> to vector<128xf32>
    %133 = vector.shape_cast %132 : vector<128xf32> to vector<1x128xf32>
    %134 = vector.broadcast %133 : vector<1x128xf32> to vector<16x128xf32>
    %135 = arith.mulf %130, %134 : vector<16x128xf32>
    %136 = arith.addf %129, %135 : vector<16x128xf32>
    %137 = vector.extract_strided_slice %87 {offsets = [0, 56], sizes = [16, 128], strides = [1, 1]} : vector<16x184xf32> to vector<16x128xf32>
    %c15 = arith.constant 15 : index
    %c0_39 = arith.constant 0 : index
    %138 = vector.load %arg6[%c15, %c0_39] : memref<64x128xf32, #tpu.memory_space<vmem>>, vector<1x128xf32>
    %139 = vector.shape_cast %138 : vector<1x128xf32> to vector<128xf32>
    %140 = vector.shape_cast %139 : vector<128xf32> to vector<1x128xf32>
    %141 = vector.broadcast %140 : vector<1x128xf32> to vector<16x128xf32>
    %142 = arith.mulf %137, %141 : vector<16x128xf32>
    %143 = arith.addf %136, %142 : vector<16x128xf32>
    %c2_40 = arith.constant 2 : index
    %c0_41 = arith.constant 0 : index
    %144 = vector.load %arg13[%c2_40, %c0_41] : memref<23x184xf32, #tpu.memory_space<vmem>>, vector<16x184xf32>
    %145 = vector.extract_strided_slice %144 {offsets = [0, 0], sizes = [16, 128], strides = [1, 1]} : vector<16x184xf32> to vector<16x128xf32>
    %c16 = arith.constant 16 : index
    %c0_42 = arith.constant 0 : index
    %146 = vector.load %arg6[%c16, %c0_42] : memref<64x128xf32, #tpu.memory_space<vmem>>, vector<1x128xf32>
    %147 = vector.shape_cast %146 : vector<1x128xf32> to vector<128xf32>
    %148 = vector.shape_cast %147 : vector<128xf32> to vector<1x128xf32>
    %149 = vector.broadcast %148 : vector<1x128xf32> to vector<16x128xf32>
    %150 = arith.mulf %145, %149 : vector<16x128xf32>
    %151 = arith.addf %143, %150 : vector<16x128xf32>
    %152 = vector.extract_strided_slice %144 {offsets = [0, 8], sizes = [16, 128], strides = [1, 1]} : vector<16x184xf32> to vector<16x128xf32>
    %c17 = arith.constant 17 : index
    %c0_43 = arith.constant 0 : index
    %153 = vector.load %arg6[%c17, %c0_43] : memref<64x128xf32, #tpu.memory_space<vmem>>, vector<1x128xf32>
    %154 = vector.shape_cast %153 : vector<1x128xf32> to vector<128xf32>
    %155 = vector.shape_cast %154 : vector<128xf32> to vector<1x128xf32>
    %156 = vector.broadcast %155 : vector<1x128xf32> to vector<16x128xf32>
    %157 = arith.mulf %152, %156 : vector<16x128xf32>
    %158 = arith.addf %151, %157 : vector<16x128xf32>
    %159 = vector.extract_strided_slice %144 {offsets = [0, 16], sizes = [16, 128], strides = [1, 1]} : vector<16x184xf32> to vector<16x128xf32>
    %c18 = arith.constant 18 : index
    %c0_44 = arith.constant 0 : index
    %160 = vector.load %arg6[%c18, %c0_44] : memref<64x128xf32, #tpu.memory_space<vmem>>, vector<1x128xf32>
    %161 = vector.shape_cast %160 : vector<1x128xf32> to vector<128xf32>
    %162 = vector.shape_cast %161 : vector<128xf32> to vector<1x128xf32>
    %163 = vector.broadcast %162 : vector<1x128xf32> to vector<16x128xf32>
    %164 = arith.mulf %159, %163 : vector<16x128xf32>
    %165 = arith.addf %158, %164 : vector<16x128xf32>
    %166 = vector.extract_strided_slice %144 {offsets = [0, 24], sizes = [16, 128], strides = [1, 1]} : vector<16x184xf32> to vector<16x128xf32>
    %c19_45 = arith.constant 19 : index
    %c0_46 = arith.constant 0 : index
    %167 = vector.load %arg6[%c19_45, %c0_46] : memref<64x128xf32, #tpu.memory_space<vmem>>, vector<1x128xf32>
    %168 = vector.shape_cast %167 : vector<1x128xf32> to vector<128xf32>
    %169 = vector.shape_cast %168 : vector<128xf32> to vector<1x128xf32>
    %170 = vector.broadcast %169 : vector<1x128xf32> to vector<16x128xf32>
    %171 = arith.mulf %166, %170 : vector<16x128xf32>
    %172 = arith.addf %165, %171 : vector<16x128xf32>
    %173 = vector.extract_strided_slice %144 {offsets = [0, 32], sizes = [16, 128], strides = [1, 1]} : vector<16x184xf32> to vector<16x128xf32>
    %c20 = arith.constant 20 : index
    %c0_47 = arith.constant 0 : index
    %174 = vector.load %arg6[%c20, %c0_47] : memref<64x128xf32, #tpu.memory_space<vmem>>, vector<1x128xf32>
    %175 = vector.shape_cast %174 : vector<1x128xf32> to vector<128xf32>
    %176 = vector.shape_cast %175 : vector<128xf32> to vector<1x128xf32>
    %177 = vector.broadcast %176 : vector<1x128xf32> to vector<16x128xf32>
    %178 = arith.mulf %173, %177 : vector<16x128xf32>
    %179 = arith.addf %172, %178 : vector<16x128xf32>
    %180 = vector.extract_strided_slice %144 {offsets = [0, 40], sizes = [16, 128], strides = [1, 1]} : vector<16x184xf32> to vector<16x128xf32>
    %c21 = arith.constant 21 : index
    %c0_48 = arith.constant 0 : index
    %181 = vector.load %arg6[%c21, %c0_48] : memref<64x128xf32, #tpu.memory_space<vmem>>, vector<1x128xf32>
    %182 = vector.shape_cast %181 : vector<1x128xf32> to vector<128xf32>
    %183 = vector.shape_cast %182 : vector<128xf32> to vector<1x128xf32>
    %184 = vector.broadcast %183 : vector<1x128xf32> to vector<16x128xf32>
    %185 = arith.mulf %180, %184 : vector<16x128xf32>
    %186 = arith.addf %179, %185 : vector<16x128xf32>
    %187 = vector.extract_strided_slice %144 {offsets = [0, 48], sizes = [16, 128], strides = [1, 1]} : vector<16x184xf32> to vector<16x128xf32>
    %c22 = arith.constant 22 : index
    %c0_49 = arith.constant 0 : index
    %188 = vector.load %arg6[%c22, %c0_49] : memref<64x128xf32, #tpu.memory_space<vmem>>, vector<1x128xf32>
    %189 = vector.shape_cast %188 : vector<1x128xf32> to vector<128xf32>
    %190 = vector.shape_cast %189 : vector<128xf32> to vector<1x128xf32>
    %191 = vector.broadcast %190 : vector<1x128xf32> to vector<16x128xf32>
    %192 = arith.mulf %187, %191 : vector<16x128xf32>
    %193 = arith.addf %186, %192 : vector<16x128xf32>
    %194 = vector.extract_strided_slice %144 {offsets = [0, 56], sizes = [16, 128], strides = [1, 1]} : vector<16x184xf32> to vector<16x128xf32>
    %c23 = arith.constant 23 : index
    %c0_50 = arith.constant 0 : index
    %195 = vector.load %arg6[%c23, %c0_50] : memref<64x128xf32, #tpu.memory_space<vmem>>, vector<1x128xf32>
    %196 = vector.shape_cast %195 : vector<1x128xf32> to vector<128xf32>
    %197 = vector.shape_cast %196 : vector<128xf32> to vector<1x128xf32>
    %198 = vector.broadcast %197 : vector<1x128xf32> to vector<16x128xf32>
    %199 = arith.mulf %194, %198 : vector<16x128xf32>
    %200 = arith.addf %193, %199 : vector<16x128xf32>
    %c3_51 = arith.constant 3 : index
    %c0_52 = arith.constant 0 : index
    %201 = vector.load %arg13[%c3_51, %c0_52] : memref<23x184xf32, #tpu.memory_space<vmem>>, vector<16x184xf32>
    %202 = vector.extract_strided_slice %201 {offsets = [0, 0], sizes = [16, 128], strides = [1, 1]} : vector<16x184xf32> to vector<16x128xf32>
    %c24_53 = arith.constant 24 : index
    %c0_54 = arith.constant 0 : index
    %203 = vector.load %arg6[%c24_53, %c0_54] : memref<64x128xf32, #tpu.memory_space<vmem>>, vector<1x128xf32>
    %204 = vector.shape_cast %203 : vector<1x128xf32> to vector<128xf32>
    %205 = vector.shape_cast %204 : vector<128xf32> to vector<1x128xf32>
    %206 = vector.broadcast %205 : vector<1x128xf32> to vector<16x128xf32>
    %207 = arith.mulf %202, %206 : vector<16x128xf32>
    %208 = arith.addf %200, %207 : vector<16x128xf32>
    %209 = vector.extract_strided_slice %201 {offsets = [0, 8], sizes = [16, 128], strides = [1, 1]} : vector<16x184xf32> to vector<16x128xf32>
    %c25 = arith.constant 25 : index
    %c0_55 = arith.constant 0 : index
    %210 = vector.load %arg6[%c25, %c0_55] : memref<64x128xf32, #tpu.memory_space<vmem>>, vector<1x128xf32>
    %211 = vector.shape_cast %210 : vector<1x128xf32> to vector<128xf32>
    %212 = vector.shape_cast %211 : vector<128xf32> to vector<1x128xf32>
    %213 = vector.broadcast %212 : vector<1x128xf32> to vector<16x128xf32>
    %214 = arith.mulf %209, %213 : vector<16x128xf32>
    %215 = arith.addf %208, %214 : vector<16x128xf32>
    %216 = vector.extract_strided_slice %201 {offsets = [0, 16], sizes = [16, 128], strides = [1, 1]} : vector<16x184xf32> to vector<16x128xf32>
    %c26 = arith.constant 26 : index
    %c0_56 = arith.constant 0 : index
    %217 = vector.load %arg6[%c26, %c0_56] : memref<64x128xf32, #tpu.memory_space<vmem>>, vector<1x128xf32>
    %218 = vector.shape_cast %217 : vector<1x128xf32> to vector<128xf32>
    %219 = vector.shape_cast %218 : vector<128xf32> to vector<1x128xf32>
    %220 = vector.broadcast %219 : vector<1x128xf32> to vector<16x128xf32>
    %221 = arith.mulf %216, %220 : vector<16x128xf32>
    %222 = arith.addf %215, %221 : vector<16x128xf32>
    %223 = vector.extract_strided_slice %201 {offsets = [0, 24], sizes = [16, 128], strides = [1, 1]} : vector<16x184xf32> to vector<16x128xf32>
    %c27 = arith.constant 27 : index
    %c0_57 = arith.constant 0 : index
    %224 = vector.load %arg6[%c27, %c0_57] : memref<64x128xf32, #tpu.memory_space<vmem>>, vector<1x128xf32>
    %225 = vector.shape_cast %224 : vector<1x128xf32> to vector<128xf32>
    %226 = vector.shape_cast %225 : vector<128xf32> to vector<1x128xf32>
    %227 = vector.broadcast %226 : vector<1x128xf32> to vector<16x128xf32>
    %228 = arith.mulf %223, %227 : vector<16x128xf32>
    %229 = arith.addf %222, %228 : vector<16x128xf32>
    %230 = vector.extract_strided_slice %201 {offsets = [0, 32], sizes = [16, 128], strides = [1, 1]} : vector<16x184xf32> to vector<16x128xf32>
    %c28 = arith.constant 28 : index
    %c0_58 = arith.constant 0 : index
    %231 = vector.load %arg6[%c28, %c0_58] : memref<64x128xf32, #tpu.memory_space<vmem>>, vector<1x128xf32>
    %232 = vector.shape_cast %231 : vector<1x128xf32> to vector<128xf32>
    %233 = vector.shape_cast %232 : vector<128xf32> to vector<1x128xf32>
    %234 = vector.broadcast %233 : vector<1x128xf32> to vector<16x128xf32>
    %235 = arith.mulf %230, %234 : vector<16x128xf32>
    %236 = arith.addf %229, %235 : vector<16x128xf32>
    %237 = vector.extract_strided_slice %201 {offsets = [0, 40], sizes = [16, 128], strides = [1, 1]} : vector<16x184xf32> to vector<16x128xf32>
    %c29 = arith.constant 29 : index
    %c0_59 = arith.constant 0 : index
    %238 = vector.load %arg6[%c29, %c0_59] : memref<64x128xf32, #tpu.memory_space<vmem>>, vector<1x128xf32>
    %239 = vector.shape_cast %238 : vector<1x128xf32> to vector<128xf32>
    %240 = vector.shape_cast %239 : vector<128xf32> to vector<1x128xf32>
    %241 = vector.broadcast %240 : vector<1x128xf32> to vector<16x128xf32>
    %242 = arith.mulf %237, %241 : vector<16x128xf32>
    %243 = arith.addf %236, %242 : vector<16x128xf32>
    %244 = vector.extract_strided_slice %201 {offsets = [0, 48], sizes = [16, 128], strides = [1, 1]} : vector<16x184xf32> to vector<16x128xf32>
    %c30 = arith.constant 30 : index
    %c0_60 = arith.constant 0 : index
    %245 = vector.load %arg6[%c30, %c0_60] : memref<64x128xf32, #tpu.memory_space<vmem>>, vector<1x128xf32>
    %246 = vector.shape_cast %245 : vector<1x128xf32> to vector<128xf32>
    %247 = vector.shape_cast %246 : vector<128xf32> to vector<1x128xf32>
    %248 = vector.broadcast %247 : vector<1x128xf32> to vector<16x128xf32>
    %249 = arith.mulf %244, %248 : vector<16x128xf32>
    %250 = arith.addf %243, %249 : vector<16x128xf32>
    %251 = vector.extract_strided_slice %201 {offsets = [0, 56], sizes = [16, 128], strides = [1, 1]} : vector<16x184xf32> to vector<16x128xf32>
    %c31 = arith.constant 31 : index
    %c0_61 = arith.constant 0 : index
    %252 = vector.load %arg6[%c31, %c0_61] : memref<64x128xf32, #tpu.memory_space<vmem>>, vector<1x128xf32>
    %253 = vector.shape_cast %252 : vector<1x128xf32> to vector<128xf32>
    %254 = vector.shape_cast %253 : vector<128xf32> to vector<1x128xf32>
    %255 = vector.broadcast %254 : vector<1x128xf32> to vector<16x128xf32>
    %256 = arith.mulf %251, %255 : vector<16x128xf32>
    %257 = arith.addf %250, %256 : vector<16x128xf32>
    %c4_62 = arith.constant 4 : index
    %c0_63 = arith.constant 0 : index
    %258 = vector.load %arg13[%c4_62, %c0_63] : memref<23x184xf32, #tpu.memory_space<vmem>>, vector<16x184xf32>
    %259 = vector.extract_strided_slice %258 {offsets = [0, 0], sizes = [16, 128], strides = [1, 1]} : vector<16x184xf32> to vector<16x128xf32>
    %c32 = arith.constant 32 : index
    %c0_64 = arith.constant 0 : index
    %260 = vector.load %arg6[%c32, %c0_64] : memref<64x128xf32, #tpu.memory_space<vmem>>, vector<1x128xf32>
    %261 = vector.shape_cast %260 : vector<1x128xf32> to vector<128xf32>
    %262 = vector.shape_cast %261 : vector<128xf32> to vector<1x128xf32>
    %263 = vector.broadcast %262 : vector<1x128xf32> to vector<16x128xf32>
    %264 = arith.mulf %259, %263 : vector<16x128xf32>
    %265 = arith.addf %257, %264 : vector<16x128xf32>
    %266 = vector.extract_strided_slice %258 {offsets = [0, 8], sizes = [16, 128], strides = [1, 1]} : vector<16x184xf32> to vector<16x128xf32>
    %c33 = arith.constant 33 : index
    %c0_65 = arith.constant 0 : index
    %267 = vector.load %arg6[%c33, %c0_65] : memref<64x128xf32, #tpu.memory_space<vmem>>, vector<1x128xf32>
    %268 = vector.shape_cast %267 : vector<1x128xf32> to vector<128xf32>
    %269 = vector.shape_cast %268 : vector<128xf32> to vector<1x128xf32>
    %270 = vector.broadcast %269 : vector<1x128xf32> to vector<16x128xf32>
    %271 = arith.mulf %266, %270 : vector<16x128xf32>
    %272 = arith.addf %265, %271 : vector<16x128xf32>
    %273 = vector.extract_strided_slice %258 {offsets = [0, 16], sizes = [16, 128], strides = [1, 1]} : vector<16x184xf32> to vector<16x128xf32>
    %c34 = arith.constant 34 : index
    %c0_66 = arith.constant 0 : index
    %274 = vector.load %arg6[%c34, %c0_66] : memref<64x128xf32, #tpu.memory_space<vmem>>, vector<1x128xf32>
    %275 = vector.shape_cast %274 : vector<1x128xf32> to vector<128xf32>
    %276 = vector.shape_cast %275 : vector<128xf32> to vector<1x128xf32>
    %277 = vector.broadcast %276 : vector<1x128xf32> to vector<16x128xf32>
    %278 = arith.mulf %273, %277 : vector<16x128xf32>
    %279 = arith.addf %272, %278 : vector<16x128xf32>
    %280 = vector.extract_strided_slice %258 {offsets = [0, 24], sizes = [16, 128], strides = [1, 1]} : vector<16x184xf32> to vector<16x128xf32>
    %c35 = arith.constant 35 : index
    %c0_67 = arith.constant 0 : index
    %281 = vector.load %arg6[%c35, %c0_67] : memref<64x128xf32, #tpu.memory_space<vmem>>, vector<1x128xf32>
    %282 = vector.shape_cast %281 : vector<1x128xf32> to vector<128xf32>
    %283 = vector.shape_cast %282 : vector<128xf32> to vector<1x128xf32>
    %284 = vector.broadcast %283 : vector<1x128xf32> to vector<16x128xf32>
    %285 = arith.mulf %280, %284 : vector<16x128xf32>
    %286 = arith.addf %279, %285 : vector<16x128xf32>
    %287 = vector.extract_strided_slice %258 {offsets = [0, 32], sizes = [16, 128], strides = [1, 1]} : vector<16x184xf32> to vector<16x128xf32>
    %c36 = arith.constant 36 : index
    %c0_68 = arith.constant 0 : index
    %288 = vector.load %arg6[%c36, %c0_68] : memref<64x128xf32, #tpu.memory_space<vmem>>, vector<1x128xf32>
    %289 = vector.shape_cast %288 : vector<1x128xf32> to vector<128xf32>
    %290 = vector.shape_cast %289 : vector<128xf32> to vector<1x128xf32>
    %291 = vector.broadcast %290 : vector<1x128xf32> to vector<16x128xf32>
    %292 = arith.mulf %287, %291 : vector<16x128xf32>
    %293 = arith.addf %286, %292 : vector<16x128xf32>
    %294 = vector.extract_strided_slice %258 {offsets = [0, 40], sizes = [16, 128], strides = [1, 1]} : vector<16x184xf32> to vector<16x128xf32>
    %c37 = arith.constant 37 : index
    %c0_69 = arith.constant 0 : index
    %295 = vector.load %arg6[%c37, %c0_69] : memref<64x128xf32, #tpu.memory_space<vmem>>, vector<1x128xf32>
    %296 = vector.shape_cast %295 : vector<1x128xf32> to vector<128xf32>
    %297 = vector.shape_cast %296 : vector<128xf32> to vector<1x128xf32>
    %298 = vector.broadcast %297 : vector<1x128xf32> to vector<16x128xf32>
    %299 = arith.mulf %294, %298 : vector<16x128xf32>
    %300 = arith.addf %293, %299 : vector<16x128xf32>
    %301 = vector.extract_strided_slice %258 {offsets = [0, 48], sizes = [16, 128], strides = [1, 1]} : vector<16x184xf32> to vector<16x128xf32>
    %c38 = arith.constant 38 : index
    %c0_70 = arith.constant 0 : index
    %302 = vector.load %arg6[%c38, %c0_70] : memref<64x128xf32, #tpu.memory_space<vmem>>, vector<1x128xf32>
    %303 = vector.shape_cast %302 : vector<1x128xf32> to vector<128xf32>
    %304 = vector.shape_cast %303 : vector<128xf32> to vector<1x128xf32>
    %305 = vector.broadcast %304 : vector<1x128xf32> to vector<16x128xf32>
    %306 = arith.mulf %301, %305 : vector<16x128xf32>
    %307 = arith.addf %300, %306 : vector<16x128xf32>
    %308 = vector.extract_strided_slice %258 {offsets = [0, 56], sizes = [16, 128], strides = [1, 1]} : vector<16x184xf32> to vector<16x128xf32>
    %c39 = arith.constant 39 : index
    %c0_71 = arith.constant 0 : index
    %309 = vector.load %arg6[%c39, %c0_71] : memref<64x128xf32, #tpu.memory_space<vmem>>, vector<1x128xf32>
    %310 = vector.shape_cast %309 : vector<1x128xf32> to vector<128xf32>
    %311 = vector.shape_cast %310 : vector<128xf32> to vector<1x128xf32>
    %312 = vector.broadcast %311 : vector<1x128xf32> to vector<16x128xf32>
    %313 = arith.mulf %308, %312 : vector<16x128xf32>
    %314 = arith.addf %307, %313 : vector<16x128xf32>
    %c5_72 = arith.constant 5 : index
    %c0_73 = arith.constant 0 : index
    %315 = vector.load %arg13[%c5_72, %c0_73] : memref<23x184xf32, #tpu.memory_space<vmem>>, vector<16x184xf32>
    %316 = vector.extract_strided_slice %315 {offsets = [0, 0], sizes = [16, 128], strides = [1, 1]} : vector<16x184xf32> to vector<16x128xf32>
    %c40 = arith.constant 40 : index
    %c0_74 = arith.constant 0 : index
    %317 = vector.load %arg6[%c40, %c0_74] : memref<64x128xf32, #tpu.memory_space<vmem>>, vector<1x128xf32>
    %318 = vector.shape_cast %317 : vector<1x128xf32> to vector<128xf32>
    %319 = vector.shape_cast %318 : vector<128xf32> to vector<1x128xf32>
    %320 = vector.broadcast %319 : vector<1x128xf32> to vector<16x128xf32>
    %321 = arith.mulf %316, %320 : vector<16x128xf32>
    %322 = arith.addf %314, %321 : vector<16x128xf32>
    %323 = vector.extract_strided_slice %315 {offsets = [0, 8], sizes = [16, 128], strides = [1, 1]} : vector<16x184xf32> to vector<16x128xf32>
    %c41 = arith.constant 41 : index
    %c0_75 = arith.constant 0 : index
    %324 = vector.load %arg6[%c41, %c0_75] : memref<64x128xf32, #tpu.memory_space<vmem>>, vector<1x128xf32>
    %325 = vector.shape_cast %324 : vector<1x128xf32> to vector<128xf32>
    %326 = vector.shape_cast %325 : vector<128xf32> to vector<1x128xf32>
    %327 = vector.broadcast %326 : vector<1x128xf32> to vector<16x128xf32>
    %328 = arith.mulf %323, %327 : vector<16x128xf32>
    %329 = arith.addf %322, %328 : vector<16x128xf32>
    %330 = vector.extract_strided_slice %315 {offsets = [0, 16], sizes = [16, 128], strides = [1, 1]} : vector<16x184xf32> to vector<16x128xf32>
    %c42 = arith.constant 42 : index
    %c0_76 = arith.constant 0 : index
    %331 = vector.load %arg6[%c42, %c0_76] : memref<64x128xf32, #tpu.memory_space<vmem>>, vector<1x128xf32>
    %332 = vector.shape_cast %331 : vector<1x128xf32> to vector<128xf32>
    %333 = vector.shape_cast %332 : vector<128xf32> to vector<1x128xf32>
    %334 = vector.broadcast %333 : vector<1x128xf32> to vector<16x128xf32>
    %335 = arith.mulf %330, %334 : vector<16x128xf32>
    %336 = arith.addf %329, %335 : vector<16x128xf32>
    %337 = vector.extract_strided_slice %315 {offsets = [0, 24], sizes = [16, 128], strides = [1, 1]} : vector<16x184xf32> to vector<16x128xf32>
    %c43 = arith.constant 43 : index
    %c0_77 = arith.constant 0 : index
    %338 = vector.load %arg6[%c43, %c0_77] : memref<64x128xf32, #tpu.memory_space<vmem>>, vector<1x128xf32>
    %339 = vector.shape_cast %338 : vector<1x128xf32> to vector<128xf32>
    %340 = vector.shape_cast %339 : vector<128xf32> to vector<1x128xf32>
    %341 = vector.broadcast %340 : vector<1x128xf32> to vector<16x128xf32>
    %342 = arith.mulf %337, %341 : vector<16x128xf32>
    %343 = arith.addf %336, %342 : vector<16x128xf32>
    %344 = vector.extract_strided_slice %315 {offsets = [0, 32], sizes = [16, 128], strides = [1, 1]} : vector<16x184xf32> to vector<16x128xf32>
    %c44 = arith.constant 44 : index
    %c0_78 = arith.constant 0 : index
    %345 = vector.load %arg6[%c44, %c0_78] : memref<64x128xf32, #tpu.memory_space<vmem>>, vector<1x128xf32>
    %346 = vector.shape_cast %345 : vector<1x128xf32> to vector<128xf32>
    %347 = vector.shape_cast %346 : vector<128xf32> to vector<1x128xf32>
    %348 = vector.broadcast %347 : vector<1x128xf32> to vector<16x128xf32>
    %349 = arith.mulf %344, %348 : vector<16x128xf32>
    %350 = arith.addf %343, %349 : vector<16x128xf32>
    %351 = vector.extract_strided_slice %315 {offsets = [0, 40], sizes = [16, 128], strides = [1, 1]} : vector<16x184xf32> to vector<16x128xf32>
    %c45 = arith.constant 45 : index
    %c0_79 = arith.constant 0 : index
    %352 = vector.load %arg6[%c45, %c0_79] : memref<64x128xf32, #tpu.memory_space<vmem>>, vector<1x128xf32>
    %353 = vector.shape_cast %352 : vector<1x128xf32> to vector<128xf32>
    %354 = vector.shape_cast %353 : vector<128xf32> to vector<1x128xf32>
    %355 = vector.broadcast %354 : vector<1x128xf32> to vector<16x128xf32>
    %356 = arith.mulf %351, %355 : vector<16x128xf32>
    %357 = arith.addf %350, %356 : vector<16x128xf32>
    %358 = vector.extract_strided_slice %315 {offsets = [0, 48], sizes = [16, 128], strides = [1, 1]} : vector<16x184xf32> to vector<16x128xf32>
    %c46 = arith.constant 46 : index
    %c0_80 = arith.constant 0 : index
    %359 = vector.load %arg6[%c46, %c0_80] : memref<64x128xf32, #tpu.memory_space<vmem>>, vector<1x128xf32>
    %360 = vector.shape_cast %359 : vector<1x128xf32> to vector<128xf32>
    %361 = vector.shape_cast %360 : vector<128xf32> to vector<1x128xf32>
    %362 = vector.broadcast %361 : vector<1x128xf32> to vector<16x128xf32>
    %363 = arith.mulf %358, %362 : vector<16x128xf32>
    %364 = arith.addf %357, %363 : vector<16x128xf32>
    %365 = vector.extract_strided_slice %315 {offsets = [0, 56], sizes = [16, 128], strides = [1, 1]} : vector<16x184xf32> to vector<16x128xf32>
    %c47 = arith.constant 47 : index
    %c0_81 = arith.constant 0 : index
    %366 = vector.load %arg6[%c47, %c0_81] : memref<64x128xf32, #tpu.memory_space<vmem>>, vector<1x128xf32>
    %367 = vector.shape_cast %366 : vector<1x128xf32> to vector<128xf32>
    %368 = vector.shape_cast %367 : vector<128xf32> to vector<1x128xf32>
    %369 = vector.broadcast %368 : vector<1x128xf32> to vector<16x128xf32>
    %370 = arith.mulf %365, %369 : vector<16x128xf32>
    %371 = arith.addf %364, %370 : vector<16x128xf32>
    %c6_82 = arith.constant 6 : index
    %c0_83 = arith.constant 0 : index
    %372 = vector.load %arg13[%c6_82, %c0_83] : memref<23x184xf32, #tpu.memory_space<vmem>>, vector<16x184xf32>
    %373 = vector.extract_strided_slice %372 {offsets = [0, 0], sizes = [16, 128], strides = [1, 1]} : vector<16x184xf32> to vector<16x128xf32>
    %c48 = arith.constant 48 : index
    %c0_84 = arith.constant 0 : index
    %374 = vector.load %arg6[%c48, %c0_84] : memref<64x128xf32, #tpu.memory_space<vmem>>, vector<1x128xf32>
    %375 = vector.shape_cast %374 : vector<1x128xf32> to vector<128xf32>
    %376 = vector.shape_cast %375 : vector<128xf32> to vector<1x128xf32>
    %377 = vector.broadcast %376 : vector<1x128xf32> to vector<16x128xf32>
    %378 = arith.mulf %373, %377 : vector<16x128xf32>
    %379 = arith.addf %371, %378 : vector<16x128xf32>
    %380 = vector.extract_strided_slice %372 {offsets = [0, 8], sizes = [16, 128], strides = [1, 1]} : vector<16x184xf32> to vector<16x128xf32>
    %c49 = arith.constant 49 : index
    %c0_85 = arith.constant 0 : index
    %381 = vector.load %arg6[%c49, %c0_85] : memref<64x128xf32, #tpu.memory_space<vmem>>, vector<1x128xf32>
    %382 = vector.shape_cast %381 : vector<1x128xf32> to vector<128xf32>
    %383 = vector.shape_cast %382 : vector<128xf32> to vector<1x128xf32>
    %384 = vector.broadcast %383 : vector<1x128xf32> to vector<16x128xf32>
    %385 = arith.mulf %380, %384 : vector<16x128xf32>
    %386 = arith.addf %379, %385 : vector<16x128xf32>
    %387 = vector.extract_strided_slice %372 {offsets = [0, 16], sizes = [16, 128], strides = [1, 1]} : vector<16x184xf32> to vector<16x128xf32>
    %c50 = arith.constant 50 : index
    %c0_86 = arith.constant 0 : index
    %388 = vector.load %arg6[%c50, %c0_86] : memref<64x128xf32, #tpu.memory_space<vmem>>, vector<1x128xf32>
    %389 = vector.shape_cast %388 : vector<1x128xf32> to vector<128xf32>
    %390 = vector.shape_cast %389 : vector<128xf32> to vector<1x128xf32>
    %391 = vector.broadcast %390 : vector<1x128xf32> to vector<16x128xf32>
    %392 = arith.mulf %387, %391 : vector<16x128xf32>
    %393 = arith.addf %386, %392 : vector<16x128xf32>
    %394 = vector.extract_strided_slice %372 {offsets = [0, 24], sizes = [16, 128], strides = [1, 1]} : vector<16x184xf32> to vector<16x128xf32>
    %c51 = arith.constant 51 : index
    %c0_87 = arith.constant 0 : index
    %395 = vector.load %arg6[%c51, %c0_87] : memref<64x128xf32, #tpu.memory_space<vmem>>, vector<1x128xf32>
    %396 = vector.shape_cast %395 : vector<1x128xf32> to vector<128xf32>
    %397 = vector.shape_cast %396 : vector<128xf32> to vector<1x128xf32>
    %398 = vector.broadcast %397 : vector<1x128xf32> to vector<16x128xf32>
    %399 = arith.mulf %394, %398 : vector<16x128xf32>
    %400 = arith.addf %393, %399 : vector<16x128xf32>
    %401 = vector.extract_strided_slice %372 {offsets = [0, 32], sizes = [16, 128], strides = [1, 1]} : vector<16x184xf32> to vector<16x128xf32>
    %c52 = arith.constant 52 : index
    %c0_88 = arith.constant 0 : index
    %402 = vector.load %arg6[%c52, %c0_88] : memref<64x128xf32, #tpu.memory_space<vmem>>, vector<1x128xf32>
    %403 = vector.shape_cast %402 : vector<1x128xf32> to vector<128xf32>
    %404 = vector.shape_cast %403 : vector<128xf32> to vector<1x128xf32>
    %405 = vector.broadcast %404 : vector<1x128xf32> to vector<16x128xf32>
    %406 = arith.mulf %401, %405 : vector<16x128xf32>
    %407 = arith.addf %400, %406 : vector<16x128xf32>
    %408 = vector.extract_strided_slice %372 {offsets = [0, 40], sizes = [16, 128], strides = [1, 1]} : vector<16x184xf32> to vector<16x128xf32>
    %c53 = arith.constant 53 : index
    %c0_89 = arith.constant 0 : index
    %409 = vector.load %arg6[%c53, %c0_89] : memref<64x128xf32, #tpu.memory_space<vmem>>, vector<1x128xf32>
    %410 = vector.shape_cast %409 : vector<1x128xf32> to vector<128xf32>
    %411 = vector.shape_cast %410 : vector<128xf32> to vector<1x128xf32>
    %412 = vector.broadcast %411 : vector<1x128xf32> to vector<16x128xf32>
    %413 = arith.mulf %408, %412 : vector<16x128xf32>
    %414 = arith.addf %407, %413 : vector<16x128xf32>
    %415 = vector.extract_strided_slice %372 {offsets = [0, 48], sizes = [16, 128], strides = [1, 1]} : vector<16x184xf32> to vector<16x128xf32>
    %c54 = arith.constant 54 : index
    %c0_90 = arith.constant 0 : index
    %416 = vector.load %arg6[%c54, %c0_90] : memref<64x128xf32, #tpu.memory_space<vmem>>, vector<1x128xf32>
    %417 = vector.shape_cast %416 : vector<1x128xf32> to vector<128xf32>
    %418 = vector.shape_cast %417 : vector<128xf32> to vector<1x128xf32>
    %419 = vector.broadcast %418 : vector<1x128xf32> to vector<16x128xf32>
    %420 = arith.mulf %415, %419 : vector<16x128xf32>
    %421 = arith.addf %414, %420 : vector<16x128xf32>
    %422 = vector.extract_strided_slice %372 {offsets = [0, 56], sizes = [16, 128], strides = [1, 1]} : vector<16x184xf32> to vector<16x128xf32>
    %c55 = arith.constant 55 : index
    %c0_91 = arith.constant 0 : index
    %423 = vector.load %arg6[%c55, %c0_91] : memref<64x128xf32, #tpu.memory_space<vmem>>, vector<1x128xf32>
    %424 = vector.shape_cast %423 : vector<1x128xf32> to vector<128xf32>
    %425 = vector.shape_cast %424 : vector<128xf32> to vector<1x128xf32>
    %426 = vector.broadcast %425 : vector<1x128xf32> to vector<16x128xf32>
    %427 = arith.mulf %422, %426 : vector<16x128xf32>
    %428 = arith.addf %421, %427 : vector<16x128xf32>
    %c7_92 = arith.constant 7 : index
    %c0_93 = arith.constant 0 : index
    %429 = vector.load %arg13[%c7_92, %c0_93] : memref<23x184xf32, #tpu.memory_space<vmem>>, vector<16x184xf32>
    %430 = vector.extract_strided_slice %429 {offsets = [0, 0], sizes = [16, 128], strides = [1, 1]} : vector<16x184xf32> to vector<16x128xf32>
    %c56 = arith.constant 56 : index
    %c0_94 = arith.constant 0 : index
    %431 = vector.load %arg6[%c56, %c0_94] : memref<64x128xf32, #tpu.memory_space<vmem>>, vector<1x128xf32>
    %432 = vector.shape_cast %431 : vector<1x128xf32> to vector<128xf32>
    %433 = vector.shape_cast %432 : vector<128xf32> to vector<1x128xf32>
    %434 = vector.broadcast %433 : vector<1x128xf32> to vector<16x128xf32>
    %435 = arith.mulf %430, %434 : vector<16x128xf32>
    %436 = arith.addf %428, %435 : vector<16x128xf32>
    %437 = vector.extract_strided_slice %429 {offsets = [0, 8], sizes = [16, 128], strides = [1, 1]} : vector<16x184xf32> to vector<16x128xf32>
    %c57 = arith.constant 57 : index
    %c0_95 = arith.constant 0 : index
    %438 = vector.load %arg6[%c57, %c0_95] : memref<64x128xf32, #tpu.memory_space<vmem>>, vector<1x128xf32>
    %439 = vector.shape_cast %438 : vector<1x128xf32> to vector<128xf32>
    %440 = vector.shape_cast %439 : vector<128xf32> to vector<1x128xf32>
    %441 = vector.broadcast %440 : vector<1x128xf32> to vector<16x128xf32>
    %442 = arith.mulf %437, %441 : vector<16x128xf32>
    %443 = arith.addf %436, %442 : vector<16x128xf32>
    %444 = vector.extract_strided_slice %429 {offsets = [0, 16], sizes = [16, 128], strides = [1, 1]} : vector<16x184xf32> to vector<16x128xf32>
    %c58 = arith.constant 58 : index
    %c0_96 = arith.constant 0 : index
    %445 = vector.load %arg6[%c58, %c0_96] : memref<64x128xf32, #tpu.memory_space<vmem>>, vector<1x128xf32>
    %446 = vector.shape_cast %445 : vector<1x128xf32> to vector<128xf32>
    %447 = vector.shape_cast %446 : vector<128xf32> to vector<1x128xf32>
    %448 = vector.broadcast %447 : vector<1x128xf32> to vector<16x128xf32>
    %449 = arith.mulf %444, %448 : vector<16x128xf32>
    %450 = arith.addf %443, %449 : vector<16x128xf32>
    %451 = vector.extract_strided_slice %429 {offsets = [0, 24], sizes = [16, 128], strides = [1, 1]} : vector<16x184xf32> to vector<16x128xf32>
    %c59 = arith.constant 59 : index
    %c0_97 = arith.constant 0 : index
    %452 = vector.load %arg6[%c59, %c0_97] : memref<64x128xf32, #tpu.memory_space<vmem>>, vector<1x128xf32>
    %453 = vector.shape_cast %452 : vector<1x128xf32> to vector<128xf32>
    %454 = vector.shape_cast %453 : vector<128xf32> to vector<1x128xf32>
    %455 = vector.broadcast %454 : vector<1x128xf32> to vector<16x128xf32>
    %456 = arith.mulf %451, %455 : vector<16x128xf32>
    %457 = arith.addf %450, %456 : vector<16x128xf32>
    %458 = vector.extract_strided_slice %429 {offsets = [0, 32], sizes = [16, 128], strides = [1, 1]} : vector<16x184xf32> to vector<16x128xf32>
    %c60 = arith.constant 60 : index
    %c0_98 = arith.constant 0 : index
    %459 = vector.load %arg6[%c60, %c0_98] : memref<64x128xf32, #tpu.memory_space<vmem>>, vector<1x128xf32>
    %460 = vector.shape_cast %459 : vector<1x128xf32> to vector<128xf32>
    %461 = vector.shape_cast %460 : vector<128xf32> to vector<1x128xf32>
    %462 = vector.broadcast %461 : vector<1x128xf32> to vector<16x128xf32>
    %463 = arith.mulf %458, %462 : vector<16x128xf32>
    %464 = arith.addf %457, %463 : vector<16x128xf32>
    %465 = vector.extract_strided_slice %429 {offsets = [0, 40], sizes = [16, 128], strides = [1, 1]} : vector<16x184xf32> to vector<16x128xf32>
    %c61 = arith.constant 61 : index
    %c0_99 = arith.constant 0 : index
    %466 = vector.load %arg6[%c61, %c0_99] : memref<64x128xf32, #tpu.memory_space<vmem>>, vector<1x128xf32>
    %467 = vector.shape_cast %466 : vector<1x128xf32> to vector<128xf32>
    %468 = vector.shape_cast %467 : vector<128xf32> to vector<1x128xf32>
    %469 = vector.broadcast %468 : vector<1x128xf32> to vector<16x128xf32>
    %470 = arith.mulf %465, %469 : vector<16x128xf32>
    %471 = arith.addf %464, %470 : vector<16x128xf32>
    %472 = vector.extract_strided_slice %429 {offsets = [0, 48], sizes = [16, 128], strides = [1, 1]} : vector<16x184xf32> to vector<16x128xf32>
    %c62 = arith.constant 62 : index
    %c0_100 = arith.constant 0 : index
    %473 = vector.load %arg6[%c62, %c0_100] : memref<64x128xf32, #tpu.memory_space<vmem>>, vector<1x128xf32>
    %474 = vector.shape_cast %473 : vector<1x128xf32> to vector<128xf32>
    %475 = vector.shape_cast %474 : vector<128xf32> to vector<1x128xf32>
    %476 = vector.broadcast %475 : vector<1x128xf32> to vector<16x128xf32>
    %477 = arith.mulf %472, %476 : vector<16x128xf32>
    %478 = arith.addf %471, %477 : vector<16x128xf32>
    %479 = vector.extract_strided_slice %429 {offsets = [0, 56], sizes = [16, 128], strides = [1, 1]} : vector<16x184xf32> to vector<16x128xf32>
    %c63 = arith.constant 63 : index
    %c0_101 = arith.constant 0 : index
    %480 = vector.load %arg6[%c63, %c0_101] : memref<64x128xf32, #tpu.memory_space<vmem>>, vector<1x128xf32>
    %481 = vector.shape_cast %480 : vector<1x128xf32> to vector<128xf32>
    %482 = vector.shape_cast %481 : vector<128xf32> to vector<1x128xf32>
    %483 = vector.broadcast %482 : vector<1x128xf32> to vector<16x128xf32>
    %484 = arith.mulf %479, %483 : vector<16x128xf32>
    %485 = arith.addf %478, %484 : vector<16x128xf32>
    %c0_102 = arith.constant 0 : index
    %c0_103 = arith.constant 0 : index
    %486 = vector.load %arg5[%c0_102, %c0_103] : memref<3x128xf32, #tpu.memory_space<vmem>>, vector<1x128xf32>
    %487 = vector.shape_cast %486 : vector<1x128xf32> to vector<128xf32>
    %488 = vector.shape_cast %487 : vector<128xf32> to vector<1x128xf32>
    %489 = vector.broadcast %488 : vector<1x128xf32> to vector<16x128xf32>
    %490 = arith.mulf %1, %489 : vector<16x128xf32>
    %c0_104 = arith.constant 0 : index
    %c0_105 = arith.constant 0 : index
    %c0_106 = arith.constant 0 : index
    %491 = vector.load %arg3[%c0_104, %c0_105, %c0_106] : memref<1x16x128xf32, #tpu.memory_space<vmem>>, vector<1x16x128xf32>
    %492 = vector.shape_cast %491 : vector<1x16x128xf32> to vector<16x128xf32>
    %c1_107 = arith.constant 1 : index
    %c0_108 = arith.constant 0 : index
    %493 = vector.load %arg5[%c1_107, %c0_108] : memref<3x128xf32, #tpu.memory_space<vmem>>, vector<1x128xf32>
    %494 = vector.shape_cast %493 : vector<1x128xf32> to vector<128xf32>
    %495 = vector.shape_cast %494 : vector<128xf32> to vector<1x128xf32>
    %496 = vector.broadcast %495 : vector<1x128xf32> to vector<16x128xf32>
    %497 = arith.mulf %492, %496 : vector<16x128xf32>
    %498 = arith.addf %490, %497 : vector<16x128xf32>
    %c2_109 = arith.constant 2 : index
    %c0_110 = arith.constant 0 : index
    %499 = vector.load %arg5[%c2_109, %c0_110] : memref<3x128xf32, #tpu.memory_space<vmem>>, vector<1x128xf32>
    %500 = vector.shape_cast %499 : vector<1x128xf32> to vector<128xf32>
    %501 = vector.shape_cast %500 : vector<128xf32> to vector<1x128xf32>
    %502 = vector.broadcast %501 : vector<1x128xf32> to vector<16x128xf32>
    %503 = arith.addf %498, %502 : vector<16x128xf32>
    %c3_111 = arith.constant 3 : index
    %c24_112 = arith.constant 24 : index
    %504 = vector.load %arg13[%c3_111, %c24_112] : memref<23x184xf32, #tpu.memory_space<vmem>>, vector<16x128xf32>
    tpu.vector_store %arg13[%c3_111, %c24_112], %503 {strides = array<i32>} : memref<23x184xf32, #tpu.memory_space<vmem>>, vector<16x128xf32>,
    %505 = vector.extract_strided_slice %503 {offsets = [0, 112], sizes = [16, 8], strides = [1, 1]} : vector<16x128xf32> to vector<16x8xf32>
    %c3_113 = arith.constant 3 : index
    %c152_114 = arith.constant 152 : index
    %506 = vector.load %arg13[%c3_113, %c152_114] : memref<23x184xf32, #tpu.memory_space<vmem>>, vector<16x8xf32>
    tpu.vector_store %arg13[%c3_113, %c152_114], %505 {strides = array<i32>} : memref<23x184xf32, #tpu.memory_space<vmem>>, vector<16x8xf32>,
    %507 = vector.extract_strided_slice %503 {offsets = [14, 0], sizes = [1, 128], strides = [1, 1]} : vector<16x128xf32> to vector<1x128xf32>
    %c19_115 = arith.constant 19 : index
    %c24_116 = arith.constant 24 : index
    %508 = vector.load %arg13[%c19_115, %c24_116] : memref<23x184xf32, #tpu.memory_space<vmem>>, vector<1x128xf32>
    tpu.vector_store %arg13[%c19_115, %c24_116], %507 {strides = array<i32>} : memref<23x184xf32, #tpu.memory_space<vmem>>, vector<1x128xf32>,
    %509 = vector.extract_strided_slice %503 {offsets = [14, 112], sizes = [1, 8], strides = [1, 1]} : vector<16x128xf32> to vector<1x8xf32>
    %c19_117 = arith.constant 19 : index
    %c152_118 = arith.constant 152 : index
    %510 = vector.load %arg13[%c19_117, %c152_118] : memref<23x184xf32, #tpu.memory_space<vmem>>, vector<1x8xf32>
    tpu.vector_store %arg13[%c19_117, %c152_118], %509 {strides = array<i32>} : memref<23x184xf32, #tpu.memory_space<vmem>>, vector<1x8xf32>,
    %cst_119 = arith.constant 0.000000e+00 : f32
    %511 = vector.broadcast %cst_119 : f32 to vector<16x128xf32>
    %c0_120 = arith.constant 0 : index
    %c0_121 = arith.constant 0 : index
    %512 = vector.load %arg13[%c0_120, %c0_121] : memref<23x184xf32, #tpu.memory_space<vmem>>, vector<16x184xf32>
    %513 = vector.extract_strided_slice %512 {offsets = [0, 0], sizes = [16, 128], strides = [1, 1]} : vector<16x184xf32> to vector<16x128xf32>
    %c0_122 = arith.constant 0 : index
    %c0_123 = arith.constant 0 : index
    %514 = vector.load %arg7[%c0_122, %c0_123] : memref<64x128xf32, #tpu.memory_space<vmem>>, vector<1x128xf32>
    %515 = vector.shape_cast %514 : vector<1x128xf32> to vector<128xf32>
    %516 = vector.shape_cast %515 : vector<128xf32> to vector<1x128xf32>
    %517 = vector.broadcast %516 : vector<1x128xf32> to vector<16x128xf32>
    %518 = arith.mulf %513, %517 : vector<16x128xf32>
    %519 = arith.addf %511, %518 : vector<16x128xf32>
    %520 = vector.extract_strided_slice %512 {offsets = [0, 8], sizes = [16, 128], strides = [1, 1]} : vector<16x184xf32> to vector<16x128xf32>
    %c1_124 = arith.constant 1 : index
    %c0_125 = arith.constant 0 : index
    %521 = vector.load %arg7[%c1_124, %c0_125] : memref<64x128xf32, #tpu.memory_space<vmem>>, vector<1x128xf32>
    %522 = vector.shape_cast %521 : vector<1x128xf32> to vector<128xf32>
    %523 = vector.shape_cast %522 : vector<128xf32> to vector<1x128xf32>
    %524 = vector.broadcast %523 : vector<1x128xf32> to vector<16x128xf32>
    %525 = arith.mulf %520, %524 : vector<16x128xf32>
    %526 = arith.addf %519, %525 : vector<16x128xf32>
    %527 = vector.extract_strided_slice %512 {offsets = [0, 16], sizes = [16, 128], strides = [1, 1]} : vector<16x184xf32> to vector<16x128xf32>
    %c2_126 = arith.constant 2 : index
    %c0_127 = arith.constant 0 : index
    %528 = vector.load %arg7[%c2_126, %c0_127] : memref<64x128xf32, #tpu.memory_space<vmem>>, vector<1x128xf32>
    %529 = vector.shape_cast %528 : vector<1x128xf32> to vector<128xf32>
    %530 = vector.shape_cast %529 : vector<128xf32> to vector<1x128xf32>
    %531 = vector.broadcast %530 : vector<1x128xf32> to vector<16x128xf32>
    %532 = arith.mulf %527, %531 : vector<16x128xf32>
    %533 = arith.addf %526, %532 : vector<16x128xf32>
    %534 = vector.extract_strided_slice %512 {offsets = [0, 24], sizes = [16, 128], strides = [1, 1]} : vector<16x184xf32> to vector<16x128xf32>
    %c3_128 = arith.constant 3 : index
    %c0_129 = arith.constant 0 : index
    %535 = vector.load %arg7[%c3_128, %c0_129] : memref<64x128xf32, #tpu.memory_space<vmem>>, vector<1x128xf32>
    %536 = vector.shape_cast %535 : vector<1x128xf32> to vector<128xf32>
    %537 = vector.shape_cast %536 : vector<128xf32> to vector<1x128xf32>
    %538 = vector.broadcast %537 : vector<1x128xf32> to vector<16x128xf32>
    %539 = arith.mulf %534, %538 : vector<16x128xf32>
    %540 = arith.addf %533, %539 : vector<16x128xf32>
    %541 = vector.extract_strided_slice %512 {offsets = [0, 32], sizes = [16, 128], strides = [1, 1]} : vector<16x184xf32> to vector<16x128xf32>
    %c4_130 = arith.constant 4 : index
    %c0_131 = arith.constant 0 : index
    %542 = vector.load %arg7[%c4_130, %c0_131] : memref<64x128xf32, #tpu.memory_space<vmem>>, vector<1x128xf32>
    %543 = vector.shape_cast %542 : vector<1x128xf32> to vector<128xf32>
    %544 = vector.shape_cast %543 : vector<128xf32> to vector<1x128xf32>
    %545 = vector.broadcast %544 : vector<1x128xf32> to vector<16x128xf32>
    %546 = arith.mulf %541, %545 : vector<16x128xf32>
    %547 = arith.addf %540, %546 : vector<16x128xf32>
    %548 = vector.extract_strided_slice %512 {offsets = [0, 40], sizes = [16, 128], strides = [1, 1]} : vector<16x184xf32> to vector<16x128xf32>
    %c5_132 = arith.constant 5 : index
    %c0_133 = arith.constant 0 : index
    %549 = vector.load %arg7[%c5_132, %c0_133] : memref<64x128xf32, #tpu.memory_space<vmem>>, vector<1x128xf32>
    %550 = vector.shape_cast %549 : vector<1x128xf32> to vector<128xf32>
    %551 = vector.shape_cast %550 : vector<128xf32> to vector<1x128xf32>
    %552 = vector.broadcast %551 : vector<1x128xf32> to vector<16x128xf32>
    %553 = arith.mulf %548, %552 : vector<16x128xf32>
    %554 = arith.addf %547, %553 : vector<16x128xf32>
    %555 = vector.extract_strided_slice %512 {offsets = [0, 48], sizes = [16, 128], strides = [1, 1]} : vector<16x184xf32> to vector<16x128xf32>
    %c6_134 = arith.constant 6 : index
    %c0_135 = arith.constant 0 : index
    %556 = vector.load %arg7[%c6_134, %c0_135] : memref<64x128xf32, #tpu.memory_space<vmem>>, vector<1x128xf32>
    %557 = vector.shape_cast %556 : vector<1x128xf32> to vector<128xf32>
    %558 = vector.shape_cast %557 : vector<128xf32> to vector<1x128xf32>
    %559 = vector.broadcast %558 : vector<1x128xf32> to vector<16x128xf32>
    %560 = arith.mulf %555, %559 : vector<16x128xf32>
    %561 = arith.addf %554, %560 : vector<16x128xf32>
    %562 = vector.extract_strided_slice %512 {offsets = [0, 56], sizes = [16, 128], strides = [1, 1]} : vector<16x184xf32> to vector<16x128xf32>
    %c7_136 = arith.constant 7 : index
    %c0_137 = arith.constant 0 : index
    %563 = vector.load %arg7[%c7_136, %c0_137] : memref<64x128xf32, #tpu.memory_space<vmem>>, vector<1x128xf32>
    %564 = vector.shape_cast %563 : vector<1x128xf32> to vector<128xf32>
    %565 = vector.shape_cast %564 : vector<128xf32> to vector<1x128xf32>
    %566 = vector.broadcast %565 : vector<1x128xf32> to vector<16x128xf32>
    %567 = arith.mulf %562, %566 : vector<16x128xf32>
    %568 = arith.addf %561, %567 : vector<16x128xf32>
    %c1_138 = arith.constant 1 : index
    %c0_139 = arith.constant 0 : index
    %569 = vector.load %arg13[%c1_138, %c0_139] : memref<23x184xf32, #tpu.memory_space<vmem>>, vector<16x184xf32>
    %570 = vector.extract_strided_slice %569 {offsets = [0, 0], sizes = [16, 128], strides = [1, 1]} : vector<16x184xf32> to vector<16x128xf32>
    %c8_140 = arith.constant 8 : index
    %c0_141 = arith.constant 0 : index
    %571 = vector.load %arg7[%c8_140, %c0_141] : memref<64x128xf32, #tpu.memory_space<vmem>>, vector<1x128xf32>
    %572 = vector.shape_cast %571 : vector<1x128xf32> to vector<128xf32>
    %573 = vector.shape_cast %572 : vector<128xf32> to vector<1x128xf32>
    %574 = vector.broadcast %573 : vector<1x128xf32> to vector<16x128xf32>
    %575 = arith.mulf %570, %574 : vector<16x128xf32>
    %576 = arith.addf %568, %575 : vector<16x128xf32>
    %577 = vector.extract_strided_slice %569 {offsets = [0, 8], sizes = [16, 128], strides = [1, 1]} : vector<16x184xf32> to vector<16x128xf32>
    %c9_142 = arith.constant 9 : index
    %c0_143 = arith.constant 0 : index
    %578 = vector.load %arg7[%c9_142, %c0_143] : memref<64x128xf32, #tpu.memory_space<vmem>>, vector<1x128xf32>
    %579 = vector.shape_cast %578 : vector<1x128xf32> to vector<128xf32>
    %580 = vector.shape_cast %579 : vector<128xf32> to vector<1x128xf32>
    %581 = vector.broadcast %580 : vector<1x128xf32> to vector<16x128xf32>
    %582 = arith.mulf %577, %581 : vector<16x128xf32>
    %583 = arith.addf %576, %582 : vector<16x128xf32>
    %584 = vector.extract_strided_slice %569 {offsets = [0, 16], sizes = [16, 128], strides = [1, 1]} : vector<16x184xf32> to vector<16x128xf32>
    %c10_144 = arith.constant 10 : index
    %c0_145 = arith.constant 0 : index
    %585 = vector.load %arg7[%c10_144, %c0_145] : memref<64x128xf32, #tpu.memory_space<vmem>>, vector<1x128xf32>
    %586 = vector.shape_cast %585 : vector<1x128xf32> to vector<128xf32>
    %587 = vector.shape_cast %586 : vector<128xf32> to vector<1x128xf32>
    %588 = vector.broadcast %587 : vector<1x128xf32> to vector<16x128xf32>
    %589 = arith.mulf %584, %588 : vector<16x128xf32>
    %590 = arith.addf %583, %589 : vector<16x128xf32>
    %591 = vector.extract_strided_slice %569 {offsets = [0, 24], sizes = [16, 128], strides = [1, 1]} : vector<16x184xf32> to vector<16x128xf32>
    %c11_146 = arith.constant 11 : index
    %c0_147 = arith.constant 0 : index
    %592 = vector.load %arg7[%c11_146, %c0_147] : memref<64x128xf32, #tpu.memory_space<vmem>>, vector<1x128xf32>
    %593 = vector.shape_cast %592 : vector<1x128xf32> to vector<128xf32>
    %594 = vector.shape_cast %593 : vector<128xf32> to vector<1x128xf32>
    %595 = vector.broadcast %594 : vector<1x128xf32> to vector<16x128xf32>
    %596 = arith.mulf %591, %595 : vector<16x128xf32>
    %597 = arith.addf %590, %596 : vector<16x128xf32>
    %598 = vector.extract_strided_slice %569 {offsets = [0, 32], sizes = [16, 128], strides = [1, 1]} : vector<16x184xf32> to vector<16x128xf32>
    %c12_148 = arith.constant 12 : index
    %c0_149 = arith.constant 0 : index
    %599 = vector.load %arg7[%c12_148, %c0_149] : memref<64x128xf32, #tpu.memory_space<vmem>>, vector<1x128xf32>
    %600 = vector.shape_cast %599 : vector<1x128xf32> to vector<128xf32>
    %601 = vector.shape_cast %600 : vector<128xf32> to vector<1x128xf32>
    %602 = vector.broadcast %601 : vector<1x128xf32> to vector<16x128xf32>
    %603 = arith.mulf %598, %602 : vector<16x128xf32>
    %604 = arith.addf %597, %603 : vector<16x128xf32>
    %605 = vector.extract_strided_slice %569 {offsets = [0, 40], sizes = [16, 128], strides = [1, 1]} : vector<16x184xf32> to vector<16x128xf32>
    %c13_150 = arith.constant 13 : index
    %c0_151 = arith.constant 0 : index
    %606 = vector.load %arg7[%c13_150, %c0_151] : memref<64x128xf32, #tpu.memory_space<vmem>>, vector<1x128xf32>
    %607 = vector.shape_cast %606 : vector<1x128xf32> to vector<128xf32>
    %608 = vector.shape_cast %607 : vector<128xf32> to vector<1x128xf32>
    %609 = vector.broadcast %608 : vector<1x128xf32> to vector<16x128xf32>
    %610 = arith.mulf %605, %609 : vector<16x128xf32>
    %611 = arith.addf %604, %610 : vector<16x128xf32>
    %612 = vector.extract_strided_slice %569 {offsets = [0, 48], sizes = [16, 128], strides = [1, 1]} : vector<16x184xf32> to vector<16x128xf32>
    %c14_152 = arith.constant 14 : index
    %c0_153 = arith.constant 0 : index
    %613 = vector.load %arg7[%c14_152, %c0_153] : memref<64x128xf32, #tpu.memory_space<vmem>>, vector<1x128xf32>
    %614 = vector.shape_cast %613 : vector<1x128xf32> to vector<128xf32>
    %615 = vector.shape_cast %614 : vector<128xf32> to vector<1x128xf32>
    %616 = vector.broadcast %615 : vector<1x128xf32> to vector<16x128xf32>
    %617 = arith.mulf %612, %616 : vector<16x128xf32>
    %618 = arith.addf %611, %617 : vector<16x128xf32>
    %619 = vector.extract_strided_slice %569 {offsets = [0, 56], sizes = [16, 128], strides = [1, 1]} : vector<16x184xf32> to vector<16x128xf32>
    %c15_154 = arith.constant 15 : index
    %c0_155 = arith.constant 0 : index
    %620 = vector.load %arg7[%c15_154, %c0_155] : memref<64x128xf32, #tpu.memory_space<vmem>>, vector<1x128xf32>
    %621 = vector.shape_cast %620 : vector<1x128xf32> to vector<128xf32>
    %622 = vector.shape_cast %621 : vector<128xf32> to vector<1x128xf32>
    %623 = vector.broadcast %622 : vector<1x128xf32> to vector<16x128xf32>
    %624 = arith.mulf %619, %623 : vector<16x128xf32>
    %625 = arith.addf %618, %624 : vector<16x128xf32>
    %c2_156 = arith.constant 2 : index
    %c0_157 = arith.constant 0 : index
    %626 = vector.load %arg13[%c2_156, %c0_157] : memref<23x184xf32, #tpu.memory_space<vmem>>, vector<16x184xf32>
    %627 = vector.extract_strided_slice %626 {offsets = [0, 0], sizes = [16, 128], strides = [1, 1]} : vector<16x184xf32> to vector<16x128xf32>
    %c16_158 = arith.constant 16 : index
    %c0_159 = arith.constant 0 : index
    %628 = vector.load %arg7[%c16_158, %c0_159] : memref<64x128xf32, #tpu.memory_space<vmem>>, vector<1x128xf32>
    %629 = vector.shape_cast %628 : vector<1x128xf32> to vector<128xf32>
    %630 = vector.shape_cast %629 : vector<128xf32> to vector<1x128xf32>
    %631 = vector.broadcast %630 : vector<1x128xf32> to vector<16x128xf32>
    %632 = arith.mulf %627, %631 : vector<16x128xf32>
    %633 = arith.addf %625, %632 : vector<16x128xf32>
    %634 = vector.extract_strided_slice %626 {offsets = [0, 8], sizes = [16, 128], strides = [1, 1]} : vector<16x184xf32> to vector<16x128xf32>
    %c17_160 = arith.constant 17 : index
    %c0_161 = arith.constant 0 : index
    %635 = vector.load %arg7[%c17_160, %c0_161] : memref<64x128xf32, #tpu.memory_space<vmem>>, vector<1x128xf32>
    %636 = vector.shape_cast %635 : vector<1x128xf32> to vector<128xf32>
    %637 = vector.shape_cast %636 : vector<128xf32> to vector<1x128xf32>
    %638 = vector.broadcast %637 : vector<1x128xf32> to vector<16x128xf32>
    %639 = arith.mulf %634, %638 : vector<16x128xf32>
    %640 = arith.addf %633, %639 : vector<16x128xf32>
    %641 = vector.extract_strided_slice %626 {offsets = [0, 16], sizes = [16, 128], strides = [1, 1]} : vector<16x184xf32> to vector<16x128xf32>
    %c18_162 = arith.constant 18 : index
    %c0_163 = arith.constant 0 : index
    %642 = vector.load %arg7[%c18_162, %c0_163] : memref<64x128xf32, #tpu.memory_space<vmem>>, vector<1x128xf32>
    %643 = vector.shape_cast %642 : vector<1x128xf32> to vector<128xf32>
    %644 = vector.shape_cast %643 : vector<128xf32> to vector<1x128xf32>
    %645 = vector.broadcast %644 : vector<1x128xf32> to vector<16x128xf32>
    %646 = arith.mulf %641, %645 : vector<16x128xf32>
    %647 = arith.addf %640, %646 : vector<16x128xf32>
    %648 = vector.extract_strided_slice %626 {offsets = [0, 24], sizes = [16, 128], strides = [1, 1]} : vector<16x184xf32> to vector<16x128xf32>
    %c19_164 = arith.constant 19 : index
    %c0_165 = arith.constant 0 : index
    %649 = vector.load %arg7[%c19_164, %c0_165] : memref<64x128xf32, #tpu.memory_space<vmem>>, vector<1x128xf32>
    %650 = vector.shape_cast %649 : vector<1x128xf32> to vector<128xf32>
    %651 = vector.shape_cast %650 : vector<128xf32> to vector<1x128xf32>
    %652 = vector.broadcast %651 : vector<1x128xf32> to vector<16x128xf32>
    %653 = arith.mulf %648, %652 : vector<16x128xf32>
    %654 = arith.addf %647, %653 : vector<16x128xf32>
    %655 = vector.extract_strided_slice %626 {offsets = [0, 32], sizes = [16, 128], strides = [1, 1]} : vector<16x184xf32> to vector<16x128xf32>
    %c20_166 = arith.constant 20 : index
    %c0_167 = arith.constant 0 : index
    %656 = vector.load %arg7[%c20_166, %c0_167] : memref<64x128xf32, #tpu.memory_space<vmem>>, vector<1x128xf32>
    %657 = vector.shape_cast %656 : vector<1x128xf32> to vector<128xf32>
    %658 = vector.shape_cast %657 : vector<128xf32> to vector<1x128xf32>
    %659 = vector.broadcast %658 : vector<1x128xf32> to vector<16x128xf32>
    %660 = arith.mulf %655, %659 : vector<16x128xf32>
    %661 = arith.addf %654, %660 : vector<16x128xf32>
    %662 = vector.extract_strided_slice %626 {offsets = [0, 40], sizes = [16, 128], strides = [1, 1]} : vector<16x184xf32> to vector<16x128xf32>
    %c21_168 = arith.constant 21 : index
    %c0_169 = arith.constant 0 : index
    %663 = vector.load %arg7[%c21_168, %c0_169] : memref<64x128xf32, #tpu.memory_space<vmem>>, vector<1x128xf32>
    %664 = vector.shape_cast %663 : vector<1x128xf32> to vector<128xf32>
    %665 = vector.shape_cast %664 : vector<128xf32> to vector<1x128xf32>
    %666 = vector.broadcast %665 : vector<1x128xf32> to vector<16x128xf32>
    %667 = arith.mulf %662, %666 : vector<16x128xf32>
    %668 = arith.addf %661, %667 : vector<16x128xf32>
    %669 = vector.extract_strided_slice %626 {offsets = [0, 48], sizes = [16, 128], strides = [1, 1]} : vector<16x184xf32> to vector<16x128xf32>
    %c22_170 = arith.constant 22 : index
    %c0_171 = arith.constant 0 : index
    %670 = vector.load %arg7[%c22_170, %c0_171] : memref<64x128xf32, #tpu.memory_space<vmem>>, vector<1x128xf32>
    %671 = vector.shape_cast %670 : vector<1x128xf32> to vector<128xf32>
    %672 = vector.shape_cast %671 : vector<128xf32> to vector<1x128xf32>
    %673 = vector.broadcast %672 : vector<1x128xf32> to vector<16x128xf32>
    %674 = arith.mulf %669, %673 : vector<16x128xf32>
    %675 = arith.addf %668, %674 : vector<16x128xf32>
    %676 = vector.extract_strided_slice %626 {offsets = [0, 56], sizes = [16, 128], strides = [1, 1]} : vector<16x184xf32> to vector<16x128xf32>
    %c23_172 = arith.constant 23 : index
    %c0_173 = arith.constant 0 : index
    %677 = vector.load %arg7[%c23_172, %c0_173] : memref<64x128xf32, #tpu.memory_space<vmem>>, vector<1x128xf32>
    %678 = vector.shape_cast %677 : vector<1x128xf32> to vector<128xf32>
    %679 = vector.shape_cast %678 : vector<128xf32> to vector<1x128xf32>
    %680 = vector.broadcast %679 : vector<1x128xf32> to vector<16x128xf32>
    %681 = arith.mulf %676, %680 : vector<16x128xf32>
    %682 = arith.addf %675, %681 : vector<16x128xf32>
    %c3_174 = arith.constant 3 : index
    %c0_175 = arith.constant 0 : index
    %683 = vector.load %arg13[%c3_174, %c0_175] : memref<23x184xf32, #tpu.memory_space<vmem>>, vector<16x184xf32>
    %684 = vector.extract_strided_slice %683 {offsets = [0, 0], sizes = [16, 128], strides = [1, 1]} : vector<16x184xf32> to vector<16x128xf32>
    %c24_176 = arith.constant 24 : index
    %c0_177 = arith.constant 0 : index
    %685 = vector.load %arg7[%c24_176, %c0_177] : memref<64x128xf32, #tpu.memory_space<vmem>>, vector<1x128xf32>
    %686 = vector.shape_cast %685 : vector<1x128xf32> to vector<128xf32>
    %687 = vector.shape_cast %686 : vector<128xf32> to vector<1x128xf32>
    %688 = vector.broadcast %687 : vector<1x128xf32> to vector<16x128xf32>
    %689 = arith.mulf %684, %688 : vector<16x128xf32>
    %690 = arith.addf %682, %689 : vector<16x128xf32>
    %691 = vector.extract_strided_slice %683 {offsets = [0, 8], sizes = [16, 128], strides = [1, 1]} : vector<16x184xf32> to vector<16x128xf32>
    %c25_178 = arith.constant 25 : index
    %c0_179 = arith.constant 0 : index
    %692 = vector.load %arg7[%c25_178, %c0_179] : memref<64x128xf32, #tpu.memory_space<vmem>>, vector<1x128xf32>
    %693 = vector.shape_cast %692 : vector<1x128xf32> to vector<128xf32>
    %694 = vector.shape_cast %693 : vector<128xf32> to vector<1x128xf32>
    %695 = vector.broadcast %694 : vector<1x128xf32> to vector<16x128xf32>
    %696 = arith.mulf %691, %695 : vector<16x128xf32>
    %697 = arith.addf %690, %696 : vector<16x128xf32>
    %698 = vector.extract_strided_slice %683 {offsets = [0, 16], sizes = [16, 128], strides = [1, 1]} : vector<16x184xf32> to vector<16x128xf32>
    %c26_180 = arith.constant 26 : index
    %c0_181 = arith.constant 0 : index
    %699 = vector.load %arg7[%c26_180, %c0_181] : memref<64x128xf32, #tpu.memory_space<vmem>>, vector<1x128xf32>
    %700 = vector.shape_cast %699 : vector<1x128xf32> to vector<128xf32>
    %701 = vector.shape_cast %700 : vector<128xf32> to vector<1x128xf32>
    %702 = vector.broadcast %701 : vector<1x128xf32> to vector<16x128xf32>
    %703 = arith.mulf %698, %702 : vector<16x128xf32>
    %704 = arith.addf %697, %703 : vector<16x128xf32>
    %705 = vector.extract_strided_slice %683 {offsets = [0, 24], sizes = [16, 128], strides = [1, 1]} : vector<16x184xf32> to vector<16x128xf32>
    %c27_182 = arith.constant 27 : index
    %c0_183 = arith.constant 0 : index
    %706 = vector.load %arg7[%c27_182, %c0_183] : memref<64x128xf32, #tpu.memory_space<vmem>>, vector<1x128xf32>
    %707 = vector.shape_cast %706 : vector<1x128xf32> to vector<128xf32>
    %708 = vector.shape_cast %707 : vector<128xf32> to vector<1x128xf32>
    %709 = vector.broadcast %708 : vector<1x128xf32> to vector<16x128xf32>
    %710 = arith.mulf %705, %709 : vector<16x128xf32>
    %711 = arith.addf %704, %710 : vector<16x128xf32>
    %712 = vector.extract_strided_slice %683 {offsets = [0, 32], sizes = [16, 128], strides = [1, 1]} : vector<16x184xf32> to vector<16x128xf32>
    %c28_184 = arith.constant 28 : index
    %c0_185 = arith.constant 0 : index
    %713 = vector.load %arg7[%c28_184, %c0_185] : memref<64x128xf32, #tpu.memory_space<vmem>>, vector<1x128xf32>
    %714 = vector.shape_cast %713 : vector<1x128xf32> to vector<128xf32>
    %715 = vector.shape_cast %714 : vector<128xf32> to vector<1x128xf32>
    %716 = vector.broadcast %715 : vector<1x128xf32> to vector<16x128xf32>
    %717 = arith.mulf %712, %716 : vector<16x128xf32>
    %718 = arith.addf %711, %717 : vector<16x128xf32>
    %719 = vector.extract_strided_slice %683 {offsets = [0, 40], sizes = [16, 128], strides = [1, 1]} : vector<16x184xf32> to vector<16x128xf32>
    %c29_186 = arith.constant 29 : index
    %c0_187 = arith.constant 0 : index
    %720 = vector.load %arg7[%c29_186, %c0_187] : memref<64x128xf32, #tpu.memory_space<vmem>>, vector<1x128xf32>
    %721 = vector.shape_cast %720 : vector<1x128xf32> to vector<128xf32>
    %722 = vector.shape_cast %721 : vector<128xf32> to vector<1x128xf32>
    %723 = vector.broadcast %722 : vector<1x128xf32> to vector<16x128xf32>
    %724 = arith.mulf %719, %723 : vector<16x128xf32>
    %725 = arith.addf %718, %724 : vector<16x128xf32>
    %726 = vector.extract_strided_slice %683 {offsets = [0, 48], sizes = [16, 128], strides = [1, 1]} : vector<16x184xf32> to vector<16x128xf32>
    %c30_188 = arith.constant 30 : index
    %c0_189 = arith.constant 0 : index
    %727 = vector.load %arg7[%c30_188, %c0_189] : memref<64x128xf32, #tpu.memory_space<vmem>>, vector<1x128xf32>
    %728 = vector.shape_cast %727 : vector<1x128xf32> to vector<128xf32>
    %729 = vector.shape_cast %728 : vector<128xf32> to vector<1x128xf32>
    %730 = vector.broadcast %729 : vector<1x128xf32> to vector<16x128xf32>
    %731 = arith.mulf %726, %730 : vector<16x128xf32>
    %732 = arith.addf %725, %731 : vector<16x128xf32>
    %733 = vector.extract_strided_slice %683 {offsets = [0, 56], sizes = [16, 128], strides = [1, 1]} : vector<16x184xf32> to vector<16x128xf32>
    %c31_190 = arith.constant 31 : index
    %c0_191 = arith.constant 0 : index
    %734 = vector.load %arg7[%c31_190, %c0_191] : memref<64x128xf32, #tpu.memory_space<vmem>>, vector<1x128xf32>
    %735 = vector.shape_cast %734 : vector<1x128xf32> to vector<128xf32>
    %736 = vector.shape_cast %735 : vector<128xf32> to vector<1x128xf32>
    %737 = vector.broadcast %736 : vector<1x128xf32> to vector<16x128xf32>
    %738 = arith.mulf %733, %737 : vector<16x128xf32>
    %739 = arith.addf %732, %738 : vector<16x128xf32>
    %c4_192 = arith.constant 4 : index
    %c0_193 = arith.constant 0 : index
    %740 = vector.load %arg13[%c4_192, %c0_193] : memref<23x184xf32, #tpu.memory_space<vmem>>, vector<16x184xf32>
    %741 = vector.extract_strided_slice %740 {offsets = [0, 0], sizes = [16, 128], strides = [1, 1]} : vector<16x184xf32> to vector<16x128xf32>
    %c32_194 = arith.constant 32 : index
    %c0_195 = arith.constant 0 : index
    %742 = vector.load %arg7[%c32_194, %c0_195] : memref<64x128xf32, #tpu.memory_space<vmem>>, vector<1x128xf32>
    %743 = vector.shape_cast %742 : vector<1x128xf32> to vector<128xf32>
    %744 = vector.shape_cast %743 : vector<128xf32> to vector<1x128xf32>
    %745 = vector.broadcast %744 : vector<1x128xf32> to vector<16x128xf32>
    %746 = arith.mulf %741, %745 : vector<16x128xf32>
    %747 = arith.addf %739, %746 : vector<16x128xf32>
    %748 = vector.extract_strided_slice %740 {offsets = [0, 8], sizes = [16, 128], strides = [1, 1]} : vector<16x184xf32> to vector<16x128xf32>
    %c33_196 = arith.constant 33 : index
    %c0_197 = arith.constant 0 : index
    %749 = vector.load %arg7[%c33_196, %c0_197] : memref<64x128xf32, #tpu.memory_space<vmem>>, vector<1x128xf32>
    %750 = vector.shape_cast %749 : vector<1x128xf32> to vector<128xf32>
    %751 = vector.shape_cast %750 : vector<128xf32> to vector<1x128xf32>
    %752 = vector.broadcast %751 : vector<1x128xf32> to vector<16x128xf32>
    %753 = arith.mulf %748, %752 : vector<16x128xf32>
    %754 = arith.addf %747, %753 : vector<16x128xf32>
    %755 = vector.extract_strided_slice %740 {offsets = [0, 16], sizes = [16, 128], strides = [1, 1]} : vector<16x184xf32> to vector<16x128xf32>
    %c34_198 = arith.constant 34 : index
    %c0_199 = arith.constant 0 : index
    %756 = vector.load %arg7[%c34_198, %c0_199] : memref<64x128xf32, #tpu.memory_space<vmem>>, vector<1x128xf32>
    %757 = vector.shape_cast %756 : vector<1x128xf32> to vector<128xf32>
    %758 = vector.shape_cast %757 : vector<128xf32> to vector<1x128xf32>
    %759 = vector.broadcast %758 : vector<1x128xf32> to vector<16x128xf32>
    %760 = arith.mulf %755, %759 : vector<16x128xf32>
    %761 = arith.addf %754, %760 : vector<16x128xf32>
    %762 = vector.extract_strided_slice %740 {offsets = [0, 24], sizes = [16, 128], strides = [1, 1]} : vector<16x184xf32> to vector<16x128xf32>
    %c35_200 = arith.constant 35 : index
    %c0_201 = arith.constant 0 : index
    %763 = vector.load %arg7[%c35_200, %c0_201] : memref<64x128xf32, #tpu.memory_space<vmem>>, vector<1x128xf32>
    %764 = vector.shape_cast %763 : vector<1x128xf32> to vector<128xf32>
    %765 = vector.shape_cast %764 : vector<128xf32> to vector<1x128xf32>
    %766 = vector.broadcast %765 : vector<1x128xf32> to vector<16x128xf32>
    %767 = arith.mulf %762, %766 : vector<16x128xf32>
    %768 = arith.addf %761, %767 : vector<16x128xf32>
    %769 = vector.extract_strided_slice %740 {offsets = [0, 32], sizes = [16, 128], strides = [1, 1]} : vector<16x184xf32> to vector<16x128xf32>
    %c36_202 = arith.constant 36 : index
    %c0_203 = arith.constant 0 : index
    %770 = vector.load %arg7[%c36_202, %c0_203] : memref<64x128xf32, #tpu.memory_space<vmem>>, vector<1x128xf32>
    %771 = vector.shape_cast %770 : vector<1x128xf32> to vector<128xf32>
    %772 = vector.shape_cast %771 : vector<128xf32> to vector<1x128xf32>
    %773 = vector.broadcast %772 : vector<1x128xf32> to vector<16x128xf32>
    %774 = arith.mulf %769, %773 : vector<16x128xf32>
    %775 = arith.addf %768, %774 : vector<16x128xf32>
    %776 = vector.extract_strided_slice %740 {offsets = [0, 40], sizes = [16, 128], strides = [1, 1]} : vector<16x184xf32> to vector<16x128xf32>
    %c37_204 = arith.constant 37 : index
    %c0_205 = arith.constant 0 : index
    %777 = vector.load %arg7[%c37_204, %c0_205] : memref<64x128xf32, #tpu.memory_space<vmem>>, vector<1x128xf32>
    %778 = vector.shape_cast %777 : vector<1x128xf32> to vector<128xf32>
    %779 = vector.shape_cast %778 : vector<128xf32> to vector<1x128xf32>
    %780 = vector.broadcast %779 : vector<1x128xf32> to vector<16x128xf32>
    %781 = arith.mulf %776, %780 : vector<16x128xf32>
    %782 = arith.addf %775, %781 : vector<16x128xf32>
    %783 = vector.extract_strided_slice %740 {offsets = [0, 48], sizes = [16, 128], strides = [1, 1]} : vector<16x184xf32> to vector<16x128xf32>
    %c38_206 = arith.constant 38 : index
    %c0_207 = arith.constant 0 : index
    %784 = vector.load %arg7[%c38_206, %c0_207] : memref<64x128xf32, #tpu.memory_space<vmem>>, vector<1x128xf32>
    %785 = vector.shape_cast %784 : vector<1x128xf32> to vector<128xf32>
    %786 = vector.shape_cast %785 : vector<128xf32> to vector<1x128xf32>
    %787 = vector.broadcast %786 : vector<1x128xf32> to vector<16x128xf32>
    %788 = arith.mulf %783, %787 : vector<16x128xf32>
    %789 = arith.addf %782, %788 : vector<16x128xf32>
    %790 = vector.extract_strided_slice %740 {offsets = [0, 56], sizes = [16, 128], strides = [1, 1]} : vector<16x184xf32> to vector<16x128xf32>
    %c39_208 = arith.constant 39 : index
    %c0_209 = arith.constant 0 : index
    %791 = vector.load %arg7[%c39_208, %c0_209] : memref<64x128xf32, #tpu.memory_space<vmem>>, vector<1x128xf32>
    %792 = vector.shape_cast %791 : vector<1x128xf32> to vector<128xf32>
    %793 = vector.shape_cast %792 : vector<128xf32> to vector<1x128xf32>
    %794 = vector.broadcast %793 : vector<1x128xf32> to vector<16x128xf32>
    %795 = arith.mulf %790, %794 : vector<16x128xf32>
    %796 = arith.addf %789, %795 : vector<16x128xf32>
    %c5_210 = arith.constant 5 : index
    %c0_211 = arith.constant 0 : index
    %797 = vector.load %arg13[%c5_210, %c0_211] : memref<23x184xf32, #tpu.memory_space<vmem>>, vector<16x184xf32>
    %798 = vector.extract_strided_slice %797 {offsets = [0, 0], sizes = [16, 128], strides = [1, 1]} : vector<16x184xf32> to vector<16x128xf32>
    %c40_212 = arith.constant 40 : index
    %c0_213 = arith.constant 0 : index
    %799 = vector.load %arg7[%c40_212, %c0_213] : memref<64x128xf32, #tpu.memory_space<vmem>>, vector<1x128xf32>
    %800 = vector.shape_cast %799 : vector<1x128xf32> to vector<128xf32>
    %801 = vector.shape_cast %800 : vector<128xf32> to vector<1x128xf32>
    %802 = vector.broadcast %801 : vector<1x128xf32> to vector<16x128xf32>
    %803 = arith.mulf %798, %802 : vector<16x128xf32>
    %804 = arith.addf %796, %803 : vector<16x128xf32>
    %805 = vector.extract_strided_slice %797 {offsets = [0, 8], sizes = [16, 128], strides = [1, 1]} : vector<16x184xf32> to vector<16x128xf32>
    %c41_214 = arith.constant 41 : index
    %c0_215 = arith.constant 0 : index
    %806 = vector.load %arg7[%c41_214, %c0_215] : memref<64x128xf32, #tpu.memory_space<vmem>>, vector<1x128xf32>
    %807 = vector.shape_cast %806 : vector<1x128xf32> to vector<128xf32>
    %808 = vector.shape_cast %807 : vector<128xf32> to vector<1x128xf32>
    %809 = vector.broadcast %808 : vector<1x128xf32> to vector<16x128xf32>
    %810 = arith.mulf %805, %809 : vector<16x128xf32>
    %811 = arith.addf %804, %810 : vector<16x128xf32>
    %812 = vector.extract_strided_slice %797 {offsets = [0, 16], sizes = [16, 128], strides = [1, 1]} : vector<16x184xf32> to vector<16x128xf32>
    %c42_216 = arith.constant 42 : index
    %c0_217 = arith.constant 0 : index
    %813 = vector.load %arg7[%c42_216, %c0_217] : memref<64x128xf32, #tpu.memory_space<vmem>>, vector<1x128xf32>
    %814 = vector.shape_cast %813 : vector<1x128xf32> to vector<128xf32>
    %815 = vector.shape_cast %814 : vector<128xf32> to vector<1x128xf32>
    %816 = vector.broadcast %815 : vector<1x128xf32> to vector<16x128xf32>
    %817 = arith.mulf %812, %816 : vector<16x128xf32>
    %818 = arith.addf %811, %817 : vector<16x128xf32>
    %819 = vector.extract_strided_slice %797 {offsets = [0, 24], sizes = [16, 128], strides = [1, 1]} : vector<16x184xf32> to vector<16x128xf32>
    %c43_218 = arith.constant 43 : index
    %c0_219 = arith.constant 0 : index
    %820 = vector.load %arg7[%c43_218, %c0_219] : memref<64x128xf32, #tpu.memory_space<vmem>>, vector<1x128xf32>
    %821 = vector.shape_cast %820 : vector<1x128xf32> to vector<128xf32>
    %822 = vector.shape_cast %821 : vector<128xf32> to vector<1x128xf32>
    %823 = vector.broadcast %822 : vector<1x128xf32> to vector<16x128xf32>
    %824 = arith.mulf %819, %823 : vector<16x128xf32>
    %825 = arith.addf %818, %824 : vector<16x128xf32>
    %826 = vector.extract_strided_slice %797 {offsets = [0, 32], sizes = [16, 128], strides = [1, 1]} : vector<16x184xf32> to vector<16x128xf32>
    %c44_220 = arith.constant 44 : index
    %c0_221 = arith.constant 0 : index
    %827 = vector.load %arg7[%c44_220, %c0_221] : memref<64x128xf32, #tpu.memory_space<vmem>>, vector<1x128xf32>
    %828 = vector.shape_cast %827 : vector<1x128xf32> to vector<128xf32>
    %829 = vector.shape_cast %828 : vector<128xf32> to vector<1x128xf32>
    %830 = vector.broadcast %829 : vector<1x128xf32> to vector<16x128xf32>
    %831 = arith.mulf %826, %830 : vector<16x128xf32>
    %832 = arith.addf %825, %831 : vector<16x128xf32>
    %833 = vector.extract_strided_slice %797 {offsets = [0, 40], sizes = [16, 128], strides = [1, 1]} : vector<16x184xf32> to vector<16x128xf32>
    %c45_222 = arith.constant 45 : index
    %c0_223 = arith.constant 0 : index
    %834 = vector.load %arg7[%c45_222, %c0_223] : memref<64x128xf32, #tpu.memory_space<vmem>>, vector<1x128xf32>
    %835 = vector.shape_cast %834 : vector<1x128xf32> to vector<128xf32>
    %836 = vector.shape_cast %835 : vector<128xf32> to vector<1x128xf32>
    %837 = vector.broadcast %836 : vector<1x128xf32> to vector<16x128xf32>
    %838 = arith.mulf %833, %837 : vector<16x128xf32>
    %839 = arith.addf %832, %838 : vector<16x128xf32>
    %840 = vector.extract_strided_slice %797 {offsets = [0, 48], sizes = [16, 128], strides = [1, 1]} : vector<16x184xf32> to vector<16x128xf32>
    %c46_224 = arith.constant 46 : index
    %c0_225 = arith.constant 0 : index
    %841 = vector.load %arg7[%c46_224, %c0_225] : memref<64x128xf32, #tpu.memory_space<vmem>>, vector<1x128xf32>
    %842 = vector.shape_cast %841 : vector<1x128xf32> to vector<128xf32>
    %843 = vector.shape_cast %842 : vector<128xf32> to vector<1x128xf32>
    %844 = vector.broadcast %843 : vector<1x128xf32> to vector<16x128xf32>
    %845 = arith.mulf %840, %844 : vector<16x128xf32>
    %846 = arith.addf %839, %845 : vector<16x128xf32>
    %847 = vector.extract_strided_slice %797 {offsets = [0, 56], sizes = [16, 128], strides = [1, 1]} : vector<16x184xf32> to vector<16x128xf32>
    %c47_226 = arith.constant 47 : index
    %c0_227 = arith.constant 0 : index
    %848 = vector.load %arg7[%c47_226, %c0_227] : memref<64x128xf32, #tpu.memory_space<vmem>>, vector<1x128xf32>
    %849 = vector.shape_cast %848 : vector<1x128xf32> to vector<128xf32>
    %850 = vector.shape_cast %849 : vector<128xf32> to vector<1x128xf32>
    %851 = vector.broadcast %850 : vector<1x128xf32> to vector<16x128xf32>
    %852 = arith.mulf %847, %851 : vector<16x128xf32>
    %853 = arith.addf %846, %852 : vector<16x128xf32>
    %c6_228 = arith.constant 6 : index
    %c0_229 = arith.constant 0 : index
    %854 = vector.load %arg13[%c6_228, %c0_229] : memref<23x184xf32, #tpu.memory_space<vmem>>, vector<16x184xf32>
    %855 = vector.extract_strided_slice %854 {offsets = [0, 0], sizes = [16, 128], strides = [1, 1]} : vector<16x184xf32> to vector<16x128xf32>
    %c48_230 = arith.constant 48 : index
    %c0_231 = arith.constant 0 : index
    %856 = vector.load %arg7[%c48_230, %c0_231] : memref<64x128xf32, #tpu.memory_space<vmem>>, vector<1x128xf32>
    %857 = vector.shape_cast %856 : vector<1x128xf32> to vector<128xf32>
    %858 = vector.shape_cast %857 : vector<128xf32> to vector<1x128xf32>
    %859 = vector.broadcast %858 : vector<1x128xf32> to vector<16x128xf32>
    %860 = arith.mulf %855, %859 : vector<16x128xf32>
    %861 = arith.addf %853, %860 : vector<16x128xf32>
    %862 = vector.extract_strided_slice %854 {offsets = [0, 8], sizes = [16, 128], strides = [1, 1]} : vector<16x184xf32> to vector<16x128xf32>
    %c49_232 = arith.constant 49 : index
    %c0_233 = arith.constant 0 : index
    %863 = vector.load %arg7[%c49_232, %c0_233] : memref<64x128xf32, #tpu.memory_space<vmem>>, vector<1x128xf32>
    %864 = vector.shape_cast %863 : vector<1x128xf32> to vector<128xf32>
    %865 = vector.shape_cast %864 : vector<128xf32> to vector<1x128xf32>
    %866 = vector.broadcast %865 : vector<1x128xf32> to vector<16x128xf32>
    %867 = arith.mulf %862, %866 : vector<16x128xf32>
    %868 = arith.addf %861, %867 : vector<16x128xf32>
    %869 = vector.extract_strided_slice %854 {offsets = [0, 16], sizes = [16, 128], strides = [1, 1]} : vector<16x184xf32> to vector<16x128xf32>
    %c50_234 = arith.constant 50 : index
    %c0_235 = arith.constant 0 : index
    %870 = vector.load %arg7[%c50_234, %c0_235] : memref<64x128xf32, #tpu.memory_space<vmem>>, vector<1x128xf32>
    %871 = vector.shape_cast %870 : vector<1x128xf32> to vector<128xf32>
    %872 = vector.shape_cast %871 : vector<128xf32> to vector<1x128xf32>
    %873 = vector.broadcast %872 : vector<1x128xf32> to vector<16x128xf32>
    %874 = arith.mulf %869, %873 : vector<16x128xf32>
    %875 = arith.addf %868, %874 : vector<16x128xf32>
    %876 = vector.extract_strided_slice %854 {offsets = [0, 24], sizes = [16, 128], strides = [1, 1]} : vector<16x184xf32> to vector<16x128xf32>
    %c51_236 = arith.constant 51 : index
    %c0_237 = arith.constant 0 : index
    %877 = vector.load %arg7[%c51_236, %c0_237] : memref<64x128xf32, #tpu.memory_space<vmem>>, vector<1x128xf32>
    %878 = vector.shape_cast %877 : vector<1x128xf32> to vector<128xf32>
    %879 = vector.shape_cast %878 : vector<128xf32> to vector<1x128xf32>
    %880 = vector.broadcast %879 : vector<1x128xf32> to vector<16x128xf32>
    %881 = arith.mulf %876, %880 : vector<16x128xf32>
    %882 = arith.addf %875, %881 : vector<16x128xf32>
    %883 = vector.extract_strided_slice %854 {offsets = [0, 32], sizes = [16, 128], strides = [1, 1]} : vector<16x184xf32> to vector<16x128xf32>
    %c52_238 = arith.constant 52 : index
    %c0_239 = arith.constant 0 : index
    %884 = vector.load %arg7[%c52_238, %c0_239] : memref<64x128xf32, #tpu.memory_space<vmem>>, vector<1x128xf32>
    %885 = vector.shape_cast %884 : vector<1x128xf32> to vector<128xf32>
    %886 = vector.shape_cast %885 : vector<128xf32> to vector<1x128xf32>
    %887 = vector.broadcast %886 : vector<1x128xf32> to vector<16x128xf32>
    %888 = arith.mulf %883, %887 : vector<16x128xf32>
    %889 = arith.addf %882, %888 : vector<16x128xf32>
    %890 = vector.extract_strided_slice %854 {offsets = [0, 40], sizes = [16, 128], strides = [1, 1]} : vector<16x184xf32> to vector<16x128xf32>
    %c53_240 = arith.constant 53 : index
    %c0_241 = arith.constant 0 : index
    %891 = vector.load %arg7[%c53_240, %c0_241] : memref<64x128xf32, #tpu.memory_space<vmem>>, vector<1x128xf32>
    %892 = vector.shape_cast %891 : vector<1x128xf32> to vector<128xf32>
    %893 = vector.shape_cast %892 : vector<128xf32> to vector<1x128xf32>
    %894 = vector.broadcast %893 : vector<1x128xf32> to vector<16x128xf32>
    %895 = arith.mulf %890, %894 : vector<16x128xf32>
    %896 = arith.addf %889, %895 : vector<16x128xf32>
    %897 = vector.extract_strided_slice %854 {offsets = [0, 48], sizes = [16, 128], strides = [1, 1]} : vector<16x184xf32> to vector<16x128xf32>
    %c54_242 = arith.constant 54 : index
    %c0_243 = arith.constant 0 : index
    %898 = vector.load %arg7[%c54_242, %c0_243] : memref<64x128xf32, #tpu.memory_space<vmem>>, vector<1x128xf32>
    %899 = vector.shape_cast %898 : vector<1x128xf32> to vector<128xf32>
    %900 = vector.shape_cast %899 : vector<128xf32> to vector<1x128xf32>
    %901 = vector.broadcast %900 : vector<1x128xf32> to vector<16x128xf32>
    %902 = arith.mulf %897, %901 : vector<16x128xf32>
    %903 = arith.addf %896, %902 : vector<16x128xf32>
    %904 = vector.extract_strided_slice %854 {offsets = [0, 56], sizes = [16, 128], strides = [1, 1]} : vector<16x184xf32> to vector<16x128xf32>
    %c55_244 = arith.constant 55 : index
    %c0_245 = arith.constant 0 : index
    %905 = vector.load %arg7[%c55_244, %c0_245] : memref<64x128xf32, #tpu.memory_space<vmem>>, vector<1x128xf32>
    %906 = vector.shape_cast %905 : vector<1x128xf32> to vector<128xf32>
    %907 = vector.shape_cast %906 : vector<128xf32> to vector<1x128xf32>
    %908 = vector.broadcast %907 : vector<1x128xf32> to vector<16x128xf32>
    %909 = arith.mulf %904, %908 : vector<16x128xf32>
    %910 = arith.addf %903, %909 : vector<16x128xf32>
    %c7_246 = arith.constant 7 : index
    %c0_247 = arith.constant 0 : index
    %911 = vector.load %arg13[%c7_246, %c0_247] : memref<23x184xf32, #tpu.memory_space<vmem>>, vector<16x184xf32>
    %912 = vector.extract_strided_slice %911 {offsets = [0, 0], sizes = [16, 128], strides = [1, 1]} : vector<16x184xf32> to vector<16x128xf32>
    %c56_248 = arith.constant 56 : index
    %c0_249 = arith.constant 0 : index
    %913 = vector.load %arg7[%c56_248, %c0_249] : memref<64x128xf32, #tpu.memory_space<vmem>>, vector<1x128xf32>
    %914 = vector.shape_cast %913 : vector<1x128xf32> to vector<128xf32>
    %915 = vector.shape_cast %914 : vector<128xf32> to vector<1x128xf32>
    %916 = vector.broadcast %915 : vector<1x128xf32> to vector<16x128xf32>
    %917 = arith.mulf %912, %916 : vector<16x128xf32>
    %918 = arith.addf %910, %917 : vector<16x128xf32>
    %919 = vector.extract_strided_slice %911 {offsets = [0, 8], sizes = [16, 128], strides = [1, 1]} : vector<16x184xf32> to vector<16x128xf32>
    %c57_250 = arith.constant 57 : index
    %c0_251 = arith.constant 0 : index
    %920 = vector.load %arg7[%c57_250, %c0_251] : memref<64x128xf32, #tpu.memory_space<vmem>>, vector<1x128xf32>
    %921 = vector.shape_cast %920 : vector<1x128xf32> to vector<128xf32>
    %922 = vector.shape_cast %921 : vector<128xf32> to vector<1x128xf32>
    %923 = vector.broadcast %922 : vector<1x128xf32> to vector<16x128xf32>
    %924 = arith.mulf %919, %923 : vector<16x128xf32>
    %925 = arith.addf %918, %924 : vector<16x128xf32>
    %926 = vector.extract_strided_slice %911 {offsets = [0, 16], sizes = [16, 128], strides = [1, 1]} : vector<16x184xf32> to vector<16x128xf32>
    %c58_252 = arith.constant 58 : index
    %c0_253 = arith.constant 0 : index
    %927 = vector.load %arg7[%c58_252, %c0_253] : memref<64x128xf32, #tpu.memory_space<vmem>>, vector<1x128xf32>
    %928 = vector.shape_cast %927 : vector<1x128xf32> to vector<128xf32>
    %929 = vector.shape_cast %928 : vector<128xf32> to vector<1x128xf32>
    %930 = vector.broadcast %929 : vector<1x128xf32> to vector<16x128xf32>
    %931 = arith.mulf %926, %930 : vector<16x128xf32>
    %932 = arith.addf %925, %931 : vector<16x128xf32>
    %933 = vector.extract_strided_slice %911 {offsets = [0, 24], sizes = [16, 128], strides = [1, 1]} : vector<16x184xf32> to vector<16x128xf32>
    %c59_254 = arith.constant 59 : index
    %c0_255 = arith.constant 0 : index
    %934 = vector.load %arg7[%c59_254, %c0_255] : memref<64x128xf32, #tpu.memory_space<vmem>>, vector<1x128xf32>
    %935 = vector.shape_cast %934 : vector<1x128xf32> to vector<128xf32>
    %936 = vector.shape_cast %935 : vector<128xf32> to vector<1x128xf32>
    %937 = vector.broadcast %936 : vector<1x128xf32> to vector<16x128xf32>
    %938 = arith.mulf %933, %937 : vector<16x128xf32>
    %939 = arith.addf %932, %938 : vector<16x128xf32>
    %940 = vector.extract_strided_slice %911 {offsets = [0, 32], sizes = [16, 128], strides = [1, 1]} : vector<16x184xf32> to vector<16x128xf32>
    %c60_256 = arith.constant 60 : index
    %c0_257 = arith.constant 0 : index
    %941 = vector.load %arg7[%c60_256, %c0_257] : memref<64x128xf32, #tpu.memory_space<vmem>>, vector<1x128xf32>
    %942 = vector.shape_cast %941 : vector<1x128xf32> to vector<128xf32>
    %943 = vector.shape_cast %942 : vector<128xf32> to vector<1x128xf32>
    %944 = vector.broadcast %943 : vector<1x128xf32> to vector<16x128xf32>
    %945 = arith.mulf %940, %944 : vector<16x128xf32>
    %946 = arith.addf %939, %945 : vector<16x128xf32>
    %947 = vector.extract_strided_slice %911 {offsets = [0, 40], sizes = [16, 128], strides = [1, 1]} : vector<16x184xf32> to vector<16x128xf32>
    %c61_258 = arith.constant 61 : index
    %c0_259 = arith.constant 0 : index
    %948 = vector.load %arg7[%c61_258, %c0_259] : memref<64x128xf32, #tpu.memory_space<vmem>>, vector<1x128xf32>
    %949 = vector.shape_cast %948 : vector<1x128xf32> to vector<128xf32>
    %950 = vector.shape_cast %949 : vector<128xf32> to vector<1x128xf32>
    %951 = vector.broadcast %950 : vector<1x128xf32> to vector<16x128xf32>
    %952 = arith.mulf %947, %951 : vector<16x128xf32>
    %953 = arith.addf %946, %952 : vector<16x128xf32>
    %954 = vector.extract_strided_slice %911 {offsets = [0, 48], sizes = [16, 128], strides = [1, 1]} : vector<16x184xf32> to vector<16x128xf32>
    %c62_260 = arith.constant 62 : index
    %c0_261 = arith.constant 0 : index
    %955 = vector.load %arg7[%c62_260, %c0_261] : memref<64x128xf32, #tpu.memory_space<vmem>>, vector<1x128xf32>
    %956 = vector.shape_cast %955 : vector<1x128xf32> to vector<128xf32>
    %957 = vector.shape_cast %956 : vector<128xf32> to vector<1x128xf32>
    %958 = vector.broadcast %957 : vector<1x128xf32> to vector<16x128xf32>
    %959 = arith.mulf %954, %958 : vector<16x128xf32>
    %960 = arith.addf %953, %959 : vector<16x128xf32>
    %961 = vector.extract_strided_slice %911 {offsets = [0, 56], sizes = [16, 128], strides = [1, 1]} : vector<16x184xf32> to vector<16x128xf32>
    %c63_262 = arith.constant 63 : index
    %c0_263 = arith.constant 0 : index
    %962 = vector.load %arg7[%c63_262, %c0_263] : memref<64x128xf32, #tpu.memory_space<vmem>>, vector<1x128xf32>
    %963 = vector.shape_cast %962 : vector<1x128xf32> to vector<128xf32>
    %964 = vector.shape_cast %963 : vector<128xf32> to vector<1x128xf32>
    %965 = vector.broadcast %964 : vector<1x128xf32> to vector<16x128xf32>
    %966 = arith.mulf %961, %965 : vector<16x128xf32>
    %967 = arith.addf %960, %966 : vector<16x128xf32>
    %c0_264 = arith.constant 0 : index
    %c0_265 = arith.constant 0 : index
    %968 = vector.load %arg8[%c0_264, %c0_265] : memref<128x128xf32, #tpu.memory_space<vmem>>, vector<128x128xf32>
    %cst_266 = arith.constant dense<0.000000e+00> : vector<16x128xf32>
    %969 = tpu.matmul %485, %968, %cst_266 {dimension_numbers = #tpu.dot_dimension_numbers<[1], [0], [0], [1], [0, 0, 1, 1], [], []>} : vector<16x128xf32>, vector<128x128xf32>, vector<16x128xf32> -> vector<16x128xf32>
    %970 = arith.addf %1, %969 : vector<16x128xf32>
    %c0_267 = arith.constant 0 : index
    %c0_268 = arith.constant 0 : index
    %971 = vector.load %arg9[%c0_267, %c0_268] : memref<128x128xf32, #tpu.memory_space<vmem>>, vector<128x128xf32>
    %cst_269 = arith.constant dense<0.000000e+00> : vector<16x128xf32>
    %972 = tpu.matmul %967, %971, %cst_269 {dimension_numbers = #tpu.dot_dimension_numbers<[1], [0], [0], [1], [0, 0, 1, 1], [], []>} : vector<16x128xf32>, vector<128x128xf32>, vector<16x128xf32> -> vector<16x128xf32>
    %973 = arith.addf %970, %972 : vector<16x128xf32>
    %c0_270 = arith.constant 0 : index
    %c0_271 = arith.constant 0 : index
    %974 = vector.load %arg10[%c0_270, %c0_271] : memref<2x128xf32, #tpu.memory_space<vmem>>, vector<1x128xf32>
    %975 = vector.shape_cast %974 : vector<1x128xf32> to vector<128xf32>
    %976 = vector.shape_cast %975 : vector<128xf32> to vector<1x128xf32>
    %977 = vector.broadcast %976 : vector<1x128xf32> to vector<16x128xf32>
    %978 = arith.addf %973, %977 : vector<16x128xf32>
    %c0_272 = arith.constant 0 : index
    %c0_273 = arith.constant 0 : index
    %979 = vector.load %arg11[%c0_272, %c0_273] : memref<128x128xf32, #tpu.memory_space<vmem>>, vector<128x128xf32>
    %cst_274 = arith.constant dense<0.000000e+00> : vector<16x128xf32>
    %980 = tpu.matmul %978, %979, %cst_274 {dimension_numbers = #tpu.dot_dimension_numbers<[1], [0], [0], [1], [0, 0, 1, 1], [], []>} : vector<16x128xf32>, vector<128x128xf32>, vector<16x128xf32> -> vector<16x128xf32>
    %c1_275 = arith.constant 1 : index
    %c0_276 = arith.constant 0 : index
    %981 = vector.load %arg10[%c1_275, %c0_276] : memref<2x128xf32, #tpu.memory_space<vmem>>, vector<1x128xf32>
    %982 = vector.shape_cast %981 : vector<1x128xf32> to vector<128xf32>
    %983 = vector.shape_cast %982 : vector<128xf32> to vector<1x128xf32>
    %984 = vector.broadcast %983 : vector<1x128xf32> to vector<16x128xf32>
    %985 = arith.addf %980, %984 : vector<16x128xf32>
    %c0_277 = arith.constant 0 : index
    %c0_278 = arith.constant 0 : index
    %c0_279 = arith.constant 0 : index
    %986 = vector.load %arg12[%c0_277, %c0_278, %c0_279] : memref<1x16x128xf32, #tpu.memory_space<vmem>>, vector<1x16x128xf32>
    %987 = vector.shape_cast %986 : vector<1x16x128xf32> to vector<16x128xf32>
    %988 = vector.shape_cast %985 : vector<16x128xf32> to vector<1x16x128xf32>
    tpu.vector_store %arg12[%c0_277, %c0_278, %c0_279], %988 {strides = array<i32>} : memref<1x16x128xf32, #tpu.memory_space<vmem>>, vector<1x16x128xf32>,
    return
  }
  func.func @transform_0(%arg0: i32) -> (i32, i32, i32) {
    %c0_i32 = arith.constant 0 : i32
    %c0_i32_0 = arith.constant 0 : i32
    %c0_i32_1 = arith.constant 0 : i32
    return %arg0, %c0_i32, %c0_i32_0 : i32, i32, i32
  }
  func.func @transform_1(%arg0: i32) -> (i32, i32, i32) {
    %c0_i32 = arith.constant 0 : i32
    %c0_i32_0 = arith.constant 0 : i32
    %c0_i32_1 = arith.constant 0 : i32
    return %arg0, %c0_i32, %c0_i32_0 : i32, i32, i32
  }
  func.func @transform_2(%arg0: i32) -> (i32, i32, i32) {
    %c0_i32 = arith.constant 0 : i32
    %c0_i32_0 = arith.constant 0 : i32
    %c0_i32_1 = arith.constant 0 : i32
    return %arg0, %c0_i32, %c0_i32_0 : i32, i32, i32
  }
  func.func @transform_3(%arg0: i32) -> (i32, i32) {
    %c0_i32 = arith.constant 0 : i32
    %c0_i32_0 = arith.constant 0 : i32
    %c0_i32_1 = arith.constant 0 : i32
    return %c0_i32, %c0_i32_0 : i32, i32
  }
  func.func @transform_4(%arg0: i32) -> (i32, i32) {
    %c0_i32 = arith.constant 0 : i32
    %c0_i32_0 = arith.constant 0 : i32
    %c0_i32_1 = arith.constant 0 : i32
    return %c0_i32, %c0_i32_0 : i32, i32
  }
  func.func @transform_5(%arg0: i32) -> (i32, i32) {
    %c0_i32 = arith.constant 0 : i32
    %c0_i32_0 = arith.constant 0 : i32
    %c0_i32_1 = arith.constant 0 : i32
    return %c0_i32, %c0_i32_0 : i32, i32
  }
  func.func @transform_6(%arg0: i32) -> (i32, i32) {
    %c0_i32 = arith.constant 0 : i32
    %c0_i32_0 = arith.constant 0 : i32
    %c0_i32_1 = arith.constant 0 : i32
    return %c0_i32, %c0_i32_0 : i32, i32
  }
  func.func @transform_7(%arg0: i32) -> (i32, i32) {
    %c0_i32 = arith.constant 0 : i32
    %c0_i32_0 = arith.constant 0 : i32
    %c0_i32_1 = arith.constant 0 : i32
    return %c0_i32, %c0_i32_0 : i32, i32
  }
  func.func @transform_8(%arg0: i32) -> (i32, i32) {
    %c0_i32 = arith.constant 0 : i32
    %c0_i32_0 = arith.constant 0 : i32
    %c0_i32_1 = arith.constant 0 : i32
    return %c0_i32, %c0_i32_0 : i32, i32
  }
  func.func @transform_9(%arg0: i32) -> (i32, i32) {
    %c0_i32 = arith.constant 0 : i32
    %c0_i32_0 = arith.constant 0 : i32
    %c0_i32_1 = arith.constant 0 : i32
    return %c0_i32, %c0_i32_0 : i32, i32
  }
  func.func @transform_10(%arg0: i32) -> (i32, i32) {
    %c0_i32 = arith.constant 0 : i32
    %c0_i32_0 = arith.constant 0 : i32
    %c0_i32_1 = arith.constant 0 : i32
    return %c0_i32, %c0_i32_0 : i32, i32
  }
  func.func @transform_11(%arg0: i32) -> (i32, i32, i32) {
    %c0_i32 = arith.constant 0 : i32
    %c0_i32_0 = arith.constant 0 : i32
    %c0_i32_1 = arith.constant 0 : i32
    return %arg0, %c0_i32, %c0_i32_0 : i32, i32, i32
  }
}

</mosaic_0001>

<llo_original>
// kernel: tile.46
$region0: #{tile.46}
  #allocation0 [shape = 's32[1]{0}', space=sflag, size = 0x4, scoped, tag = 'scoped memory for tile.46']
  %s0 = inlined_call_operand.vmem [shape: f32[8], index: 0, kind: input, shape index: {}]
  %s1 = inlined_call_operand.vmem [shape: f32[16,8], index: 1, kind: output, shape index: {}]
  // Predicated region
  $region2: #{tile.46} parent=0 // pred_check
    _
  $region3: #{tile.46} parent=0 // pred_check_branch
    %3 = sbr.rel (0) target = $region5
  $region4: #{tile.46} parent=0 // pred_region
    _
  $region5: #{tile.46} parent=0 // pred_fallthru
    _
  %v4 = vld [vmem:[%s0] ss:$0 sm:$0xff]
  %5 = vst [vmem:[%s1] sm:$0xff] %v4
  %s6 = scalar_lea.vmem %s1, 8
  %7 = vst [vmem:[%s6] sm:$0xff] %v4

// kernel: tile.54
$region0: #{tile.54}
  %s0 = inlined_call_operand.vmem [shape: f32[16,8], index: 0, kind: input, shape index: {}]
  %s1 = inlined_call_operand.vmem [shape: f32[1,128], index: 1, kind: output, shape index: {}]
  $region1: #{tile.54} parent=0
    #allocation0 [shape = 'u8[4096]{0}', space=vmem, size = 0x1000, scoped, tag = 'scoped mem for output reshape']
    %v2 = vld [vmem:[%s0] sm:$0x1]
    %vm3 = vcmask 64512
    %4 = vst.msk [vmem:[#allocation0] sm:$0x1] %vm3, %v2
    %s5 = scalar_lea.vmem %s0, 15
    %v6 = vld [vmem:[%s5] sm:$0x1]
    %7 = vrot.lane.b32.xlu0 %v6, 120
    %v8 = vpop.permute.xlu0 %7
    %vm9 = vcmask 1048512
    %10 = vst.msk [vmem:[#allocation0] sm:$0x1] %vm9, %v8
    %s11 = scalar_lea.vmem %s0, 14
    %v12 = vld [vmem:[%s11] sm:$0x1]
    %13 = vrot.lane.b32.xlu0 %v12, 112
    %v14 = vpop.permute.xlu0 %13
    %vm15 = vcmask 982912
    %16 = vst.msk [vmem:[#allocation0] sm:$0x1] %vm15, %v14
    %s17 = scalar_lea.vmem %s0, 13
    %v18 = vld [vmem:[%s17] sm:$0x1]
    %19 = vrot.lane.b32.xlu0 %v18, 104
    %v20 = vpop.permute.xlu0 %19
    %vm21 = vcmask 917312
    %22 = vst.msk [vmem:[#allocation0] sm:$0x1] %vm21, %v20
    %s23 = scalar_lea.vmem %s0, 12
    %v24 = vld [vmem:[%s23] sm:$0x1]
    %25 = vrot.lane.b32.xlu0 %v24, 96
    %v26 = vpop.permute.xlu0 %25
    %vm27 = vcmask 851712
    %28 = vst.msk [vmem:[#allocation0] sm:$0x1] %vm27, %v26
    %s29 = scalar_lea.vmem %s0, 11
    %v30 = vld [vmem:[%s29] sm:$0x1]
    %31 = vrot.lane.b32.xlu0 %v30, 88
    %v32 = vpop.permute.xlu0 %31
    %vm33 = vcmask 786112
    %34 = vst.msk [vmem:[#allocation0] sm:$0x1] %vm33, %v32
    %s35 = scalar_lea.vmem %s0, 10
    %v36 = vld [vmem:[%s35] sm:$0x1]
    %37 = vrot.lane.b32.xlu0 %v36, 80
    %v38 = vpop.permute.xlu0 %37
    %vm39 = vcmask 720512
    %40 = vst.msk [vmem:[#allocation0] sm:$0x1] %vm39, %v38
    %s41 = scalar_lea.vmem %s0, 9
    %v42 = vld [vmem:[%s41] sm:$0x1]
    %43 = vrot.lane.b32.xlu0 %v42, 72
    %v44 = vpop.permute.xlu0 %43
    %vm45 = vcmask 654912
    %46 = vst.msk [vmem:[#allocation0] sm:$0x1] %vm45, %v44
    %s47 = scalar_lea.vmem %s0, 8
    %v48 = vld [vmem:[%s47] sm:$0x1]
    %49 = vrot.lane.b32.xlu0 %v48, 64
    %v50 = vpop.permute.xlu0 %49
    %vm51 = vcmask 589312
    %52 = vst.msk [vmem:[#allocation0] sm:$0x1] %vm51, %v50
    %s53 = scalar_lea.vmem %s0, 7
    %v54 = vld [vmem:[%s53] sm:$0x1]
    %55 = vrot.lane.b32.xlu0 %v54, 56
    %v56 = vpop.permute.xlu0 %55
    %vm57 = vcmask 523712
    %58 = vst.msk [vmem:[#allocation0] sm:$0x1] %vm57, %v56
    %s59 = scalar_lea.vmem %s0, 6
    %v60 = vld [vmem:[%s59] sm:$0x1]
    %61 = vrot.lane.b32.xlu0 %v60, 48
    %v62 = vpop.permute.xlu0 %61
    %vm63 = vcmask 458112
    %64 = vst.msk [vmem:[#allocation0] sm:$0x1] %vm63, %v62
    %s65 = scalar_lea.vmem %s0, 5
    %v66 = vld [vmem:[%s65] sm:$0x1]
    %67 = vrot.lane.b32.xlu0 %v66, 40
    %v68 = vpop.permute.xlu0 %67
    %vm69 = vcmask 392512
    %70 = vst.msk [vmem:[#allocation0] sm:$0x1] %vm69, %v68
    %s71 = scalar_lea.vmem %s0, 4
    %v72 = vld [vmem:[%s71] sm:$0x1]
    %73 = vrot.lane.b32.xlu0 %v72, 32
    %v74 = vpop.permute.xlu0 %73
    %vm75 = vcmask 326912
    %76 = vst.msk [vmem:[#allocation0] sm:$0x1] %vm75, %v74
    %s77 = scalar_lea.vmem %s0, 3
    %v78 = vld [vmem:[%s77] sm:$0x1]
    %79 = vrot.lane.b32.xlu0 %v78, 24
    %v80 = vpop.permute.xlu0 %79
    %vm81 = vcmask 261312
    %82 = vst.msk [vmem:[#allocation0] sm:$0x1] %vm81, %v80
    %s83 = scalar_lea.vmem %s0, 2
    %v84 = vld [vmem:[%s83] sm:$0x1]
    %85 = vrot.lane.b32.xlu0 %v84, 16
    %v86 = vpop.permute.xlu0 %85
    %vm87 = vcmask 195712
    %88 = vst.msk [vmem:[#allocation0] sm:$0x1] %vm87, %v86
    %s89 = scalar_lea.vmem %s0, 1
    %v90 = vld [vmem:[%s89] sm:$0x1]
    %91 = vrot.lane.b32.xlu0 %v90, 8
    %v92 = vpop.permute.xlu0 %91
    %vm93 = vcmask 130112
    %94 = vst.msk [vmem:[#allocation0] sm:$0x1] %vm93, %v92
    %s96 = sshllo.u32 0, 1
    %v98 = vld [vmem:[#allocation0] sm:%s96]
    %s99 = sshllo.u32 0, 1
    %100 = vst [vmem:[%s1] sm:%s99] %v98

</llo_original>
